<compile_context>
chip_gen: v6e
topology: v6e:2x2x1
jax: 0.10.0
libtpu: 0.0.40
codegen_flags: <defaults>
</compile_context>

<pallas_src>
import functools

import jax
import jax.numpy as jnp
from jax.experimental import pallas as pl
from jax.experimental.pallas import tpu as pltpu


def _round_up(x, m):
    return (x + m - 1) // m * m


def _cdiv(a, b):
    return (a + b - 1) // b


def _pad2d(a, rows, cols, dtype):
    """Zero-pad / cast a 2-D array; returns the input unchanged if already right."""
    a = jnp.asarray(a)
    if a.shape == (rows, cols) and a.dtype == jnp.dtype(dtype):
        return a
    out = jnp.zeros((rows, cols), dtype)
    return out.at[: a.shape[0], : a.shape[1]].set(a.astype(dtype))


@functools.lru_cache(maxsize=None)
def _bf16_epilogue_default():
    """bf16 VPU epilogue on v6e/v7x; f32 on earlier generations (no bf16 VPU)."""
    try:
        kind = jax.devices()[0].device_kind.lower()
    except Exception:
        return False
    if any(g in kind for g in ("v2", "v3", "v4", "v5")):
        return False
    return True


def prepare_pretrain_params(w_vision, b_vision, w_fc, b_fc):
    """Pad + cast the (constant) weights once at model setup, not per forward call."""
    d_in, hidden = w_vision.shape
    hidden2, n_out = w_fc.shape
    assert hidden2 == hidden
    d_in_p = _round_up(d_in, 128)
    hidden_p = _round_up(hidden, 128)    # 500 -> 512
    n_out_p = _round_up(n_out, 128)      # 10  -> 128
    return {
        "wv": _pad2d(w_vision, d_in_p, hidden_p, jnp.bfloat16),
        "bv": _pad2d(jnp.reshape(jnp.asarray(b_vision), (1, -1)), 1, hidden_p, jnp.float32),
        "wfc": _pad2d(w_fc, hidden_p, n_out_p, jnp.bfloat16),
        "bfc": _pad2d(jnp.reshape(jnp.asarray(b_fc), (1, -1)), 1, n_out_p, jnp.float32),
        "d_in": int(d_in),
        "hidden": int(hidden),
        "n_out": int(n_out),
    }


def _make_kernel(bf16_epilogue):
    def kernel(x_ref, wv_ref, bv_ref, wfc_ref, bfc_ref, o_ref, acc_ref):
        k = pl.program_id(1)

        @pl.when(k == 0)
        def _init():
            acc_ref[...] = jnp.zeros_like(acc_ref)

        # Partial vision_module matmul: bf16 into the MXU, f32 accumulation.
        acc_ref[...] += jnp.dot(
            x_ref[...].astype(jnp.bfloat16), wv_ref[...],
            preferred_element_type=jnp.float32)

        @pl.when(k == pl.num_programs(1) - 1)
        def _finalize():
            h = acc_ref[...]
            if bf16_epilogue:
                hb = h.astype(jnp.bfloat16) + bv_ref[...].astype(jnp.bfloat16)
                slope = jnp.asarray(0.01, jnp.bfloat16)
                hb = jnp.where(hb >= 0, hb, slope * hb)
            else:
                hf = h + bv_ref[...]
                hf = jnp.where(hf >= 0, hf, jnp.float32(0.01) * hf)
                hb = hf.astype(jnp.bfloat16)
            # fc: [b_tile, 512] @ [512, 128] with f32 accumulation.
            out = jnp.dot(hb, wfc_ref[...], preferred_element_type=jnp.float32)
            o_ref[...] = (out + bfc_ref[...]).astype(o_ref.dtype)

    return kernel


def pretrain_net(x, params, *, max_b_tile=1024, k_tile=None, vmem_limit_bytes=None):
    """x: [B, C, H, W] (or [B, d_in]) float32/bf16.  Returns [B, 10] float32."""
    B = x.shape[0]
    d_in = params["d_in"]
    n_out = params["n_out"]
    x2 = jnp.reshape(x, (B, -1))
    assert x2.shape[1] == d_in, "input feature size mismatch with vision weights"

    wv, bv, wfc, bfc = params["wv"], params["bv"], params["wfc"], params["bfc"]
    d_in_p, hidden_p = wv.shape
    n_out_p = wfc.shape[1]

    # ---- explicit VMEM limit (defaults are only 16/32 MiB scoped; 64 MiB physical v7x) ----
    if vmem_limit_bytes is None:
        try:
            cap = int(pltpu.get_tpu_info().vmem_capacity_bytes)
        except Exception:
            cap = 64 * 1024 * 1024                      # conservative (v7x) fallback
        vmem_limit_bytes = max(32 * 1024 * 1024,
                               min(cap - 8 * 1024 * 1024, 100 * 1024 * 1024))

    # ---- batch tiling: bounded pad waste, >=2 steps (B > 8) so both v7x TCs get work ----
    if B <= 8:
        b_tile = B                                      # whole tiny batch, no padding
    else:
        n_b = max(2, _cdiv(B, max_b_tile))
        b_tile = _round_up(_cdiv(B, n_b), 8)
    b_pad = _round_up(B, b_tile)

    # ---- K (d_in) tiling sized from the VMEM budget so Wv need not be fully resident ----
    x_bytes = x2.dtype.itemsize
    fixed = (hidden_p * n_out_p * 2                    # Wfc (resident)
             + (hidden_p + n_out_p) * 4                # biases
             + b_tile * hidden_p * 4                   # f32 accumulator scratch
             + 2 * b_tile * n_out_p * 4                # output double-buffer
             + 2 * 1024 * 1024)                        # compiler slack
    per_k_col = 128 * (2 * b_tile * x_bytes + 2 * hidden_p * 2)   # x + Wv buffers
    if k_tile is None:
        max_cols = max(1, (vmem_limit_bytes - fixed) // per_k_col)
        k_tile = min(d_in_p, int(max_cols) * 128)
    n_k = _cdiv(d_in_p, k_tile)
    k_tile = _round_up(_cdiv(d_in_p, n_k), 128)        # balance the K steps
    n_k = _cdiv(d_in_p, k_tile)
    d_in_pp = n_k * k_tile

    # ---- x: no wrapper-side copy/cast when no padding is needed; else pad once in bf16 ----
    if (b_pad, d_in_pp) == (B, d_in):
        x_p = x2                                       # streamed as-is, cast in-kernel
    else:
        x_p = _pad2d(x2, b_pad, d_in_pp, jnp.bfloat16)
    wv_p = _pad2d(wv, d_in_pp, hidden_p, jnp.bfloat16)  # no-op unless K was re-padded

    grid = (b_pad // b_tile, n_k)

    single_buf = {"pipeline_mode": pl.Buffered(1)}      # constant blocks: no double-buffer
    wv_mode = single_buf if n_k == 1 else {}            # Wv pipelines along K otherwise

    in_specs = [
        pl.BlockSpec((b_tile, k_tile), lambda i, k: (i, k)),            # x tile
        pl.BlockSpec((k_tile, hidden_p), lambda i, k: (k, 0), **wv_mode),   # Wv
        pl.BlockSpec((1, hidden_p), lambda i, k: (0, 0), **single_buf),     # bv
        pl.BlockSpec((hidden_p, n_out_p), lambda i, k: (0, 0), **single_buf),  # Wfc
        pl.BlockSpec((1, n_out_p), lambda i, k: (0, 0), **single_buf),       # bfc
    ]
    out_specs = pl.BlockSpec((b_tile, n_out_p), lambda i, k: (i, 0))

    cost = pl.CostEstimate(
        flops=2 * b_pad * d_in_pp * hidden_p + 2 * b_pad * hidden_p * n_out_p,
        transcendentals=0,
        bytes_accessed=int(
            x_p.size * x_p.dtype.itemsize + wv_p.size * 2 + wfc.size * 2
            + bv.size * 4 + bfc.size * 4 + b_pad * n_out_p * 4),
    )

    out_p = pl.pallas_call(
        _make_kernel(_bf16_epilogue_default()),
        out_shape=jax.ShapeDtypeStruct((b_pad, n_out_p), jnp.float32),
        grid_spec=pltpu.PrefetchScalarGridSpec(
            num_scalar_prefetch=0,
            grid=grid,
            in_specs=in_specs,
            out_specs=out_specs,
            scratch_shapes=[pltpu.VMEM((b_tile, hidden_p), jnp.float32)],
        ),
        compiler_params=pltpu.CompilerParams(
            dimension_semantics=("parallel", "arbitrary"),
            vmem_limit_bytes=int(vmem_limit_bytes),
        ),
        cost_estimate=cost,
    )(x_p, wv_p, bv, wfc, bfc)

    # Slice away batch / lane padding outside the kernel.
    return out_p[:B, :n_out]


def _reference(x, w_vision, b_vision, w_fc, b_fc):
    B = x.shape[0]
    xf = x.reshape(B, -1)
    h = xf @ w_vision + b_vision.reshape(1, -1)
    h = jnp.where(h >= 0, h, 0.01 * h)
    return h @ w_fc + b_fc.reshape(1, -1)


if __name__ == "__main__":
    key = jax.random.PRNGKey(0)
    k_x, k_wv, k_bv, k_wf, k_bf, k_x2 = jax.random.split(key, 6)

    # Small NCHW input consistent with an image-style vision module.
    B, C, H, W = 2, 4, 16, 16
    d_in = C * H * W          # 1024
    hidden = 500              # vision_module output features
    n_out = 10                # fc = nn.Linear(500, 10)

    x = jax.random.normal(k_x, (B, C, H, W), dtype=jnp.float32)

    # Deterministic synthetic parameters (PyTorch-Linear-style uniform ranges).
    lim_v = 1.0 / jnp.sqrt(jnp.float32(d_in))
    w_vision = jax.random.uniform(k_wv, (d_in, hidden), jnp.float32, -lim_v, lim_v)
    b_vision = jax.random.uniform(k_bv, (hidden,), jnp.float32, -lim_v, lim_v)
    lim_f = 1.0 / jnp.sqrt(jnp.float32(hidden))
    w_fc = jax.random.uniform(k_wf, (hidden, n_out), jnp.float32, -lim_f, lim_f)
    b_fc = jax.random.uniform(k_bf, (n_out,), jnp.float32, -lim_f, lim_f)

    # Weights are padded / cast to bf16 exactly once (model setup), not per call.
    params = prepare_pretrain_params(w_vision, b_vision, w_fc, b_fc)

    # Main check: B=2, no wrapper-side x copy, single K step, resident weights.
    out = jax.block_until_ready(pretrain_net(x, params))
    ref = _reference(x, w_vision, b_vision, w_fc, b_fc)
    assert out.shape == (B, n_out)
    assert jnp.allclose(out, ref, atol=3e-2, rtol=3e-2), float(jnp.max(jnp.abs(out - ref)))

    # Second check: exercise the general path (batch padding, 2 batch tiles, K-tiled
    # reduction through the f32 accumulator scratch).
    B2 = 10
    x2 = jax.random.normal(k_x2, (B2, C, H, W), dtype=jnp.float32)
    out2 = jax.block_until_ready(pretrain_net(x2, params, k_tile=256))
    ref2 = _reference(x2, w_vision, b_vision, w_fc, b_fc)
    assert out2.shape == (B2, n_out)
    assert jnp.allclose(out2, ref2, atol=3e-2, rtol=3e-2), float(jnp.max(jnp.abs(out2 - ref2)))

    print("KERNEL_OK")
</pallas_src>

<mosaic_0001>
module attributes {stable_mosaic.version = 11 : i64} {
  func.func @kernel(%arg0: i32, %arg1: i32, %arg2: memref<2x1024xf32, #tpu.memory_space<vmem>>, %arg3: memref<1024x512xbf16, #tpu.memory_space<vmem>>, %arg4: memref<1x512xf32, #tpu.memory_space<vmem>>, %arg5: memref<512x128xbf16, #tpu.memory_space<vmem>>, %arg6: memref<1x128xf32, #tpu.memory_space<vmem>>, %arg7: memref<2x128xf32, #tpu.memory_space<vmem>>, %arg8: memref<2x512xf32, #tpu.memory_space<vmem>>) attributes {dimension_semantics = [#tpu.dimension_semantics<parallel>, #tpu.dimension_semantics<arbitrary>], iteration_bounds = array<i64: 1, 1>, scalar_prefetch = 0 : i64, scratch_operands = 1 : i64, tpu.core_type = #tpu.core_type<tc>, window_params = [{transform_indices = @transform_0, window_bounds = array<i64: 2, 1024>}, {pipeline_mode = #tpu.pipeline_mode<synchronous>, transform_indices = @transform_1, window_bounds = array<i64: 1024, 512>}, {pipeline_mode = #tpu.pipeline_mode<synchronous>, transform_indices = @transform_2, window_bounds = array<i64: 1, 512>}, {pipeline_mode = #tpu.pipeline_mode<synchronous>, transform_indices = @transform_3, window_bounds = array<i64: 512, 128>}, {pipeline_mode = #tpu.pipeline_mode<synchronous>, transform_indices = @transform_4, window_bounds = array<i64: 1, 128>}, {transform_indices = @transform_5, window_bounds = array<i64: 2, 128>}]} {
    %c0_i32 = arith.constant 0 : i32
    %0 = arith.cmpi eq, %arg1, %c0_i32 : i32
    %1 = arith.extui %0 : i1 to i32
    %c0_i32_0 = arith.constant 0 : i32
    %2 = arith.cmpi ne, %1, %c0_i32_0 : i32
    scf.if %2 {
      %cst_10 = arith.constant 0.000000e+00 : f32
      %13 = vector.broadcast %cst_10 : f32 to vector<2x512xf32>
      %c0_11 = arith.constant 0 : index
      %c0_12 = arith.constant 0 : index
      %14 = vector.load %arg8[%c0_11, %c0_12] : memref<2x512xf32, #tpu.memory_space<vmem>>, vector<2x512xf32>
      tpu.vector_store %arg8[%c0_11, %c0_12], %13 {strides = array<i32>} : memref<2x512xf32, #tpu.memory_space<vmem>>, vector<2x512xf32>,
    } else {
    }
    %c0 = arith.constant 0 : index
    %c0_1 = arith.constant 0 : index
    %3 = vector.load %arg8[%c0, %c0_1] : memref<2x512xf32, #tpu.memory_space<vmem>>, vector<2x512xf32>
    %c0_2 = arith.constant 0 : index
    %c0_3 = arith.constant 0 : index
    %4 = vector.load %arg2[%c0_2, %c0_3] : memref<2x1024xf32, #tpu.memory_space<vmem>>, vector<2x1024xf32>
    %5 = arith.truncf %4 : vector<2x1024xf32> to vector<2x1024xbf16>
    %c0_4 = arith.constant 0 : index
    %c0_5 = arith.constant 0 : index
    %6 = vector.load %arg3[%c0_4, %c0_5] : memref<1024x512xbf16, #tpu.memory_space<vmem>>, vector<1024x512xbf16>
    %cst = arith.constant dense<0.000000e+00> : vector<2x512xf32>
    %7 = tpu.matmul %5, %6, %cst {dimension_numbers = #tpu.dot_dimension_numbers<[1], [0], [0], [1], [0, 0, 1, 1], [], []>} : vector<2x1024xbf16>, vector<1024x512xbf16>, vector<2x512xf32> -> vector<2x512xf32>
    %8 = arith.addf %3, %7 : vector<2x512xf32>
    %c0_6 = arith.constant 0 : index
    %c0_7 = arith.constant 0 : index
    %9 = vector.load %arg8[%c0_6, %c0_7] : memref<2x512xf32, #tpu.memory_space<vmem>>, vector<2x512xf32>
    tpu.vector_store %arg8[%c0_6, %c0_7], %8 {strides = array<i32>} : memref<2x512xf32, #tpu.memory_space<vmem>>, vector<2x512xf32>,
    %c0_i32_8 = arith.constant 0 : i32
    %10 = arith.cmpi eq, %arg1, %c0_i32_8 : i32
    %11 = arith.extui %10 : i1 to i32
    %c0_i32_9 = arith.constant 0 : i32
    %12 = arith.cmpi ne, %11, %c0_i32_9 : i32
    scf.if %12 {
      %c0_10 = arith.constant 0 : index
      %c0_11 = arith.constant 0 : index
      %13 = vector.load %arg8[%c0_10, %c0_11] : memref<2x512xf32, #tpu.memory_space<vmem>>, vector<2x512xf32>
      %14 = arith.truncf %13 : vector<2x512xf32> to vector<2x512xbf16>
      %c0_12 = arith.constant 0 : index
      %c0_13 = arith.constant 0 : index
      %15 = vector.load %arg4[%c0_12, %c0_13] : memref<1x512xf32, #tpu.memory_space<vmem>>, vector<1x512xf32>
      %16 = arith.truncf %15 : vector<1x512xf32> to vector<1x512xbf16>
      %17 = vector.broadcast %16 : vector<1x512xbf16> to vector<2x512xbf16>
      %18 = arith.addf %14, %17 : vector<2x512xbf16>
      %cst_14 = arith.constant 0.000000e+00 : bf16
      %19 = vector.broadcast %cst_14 : bf16 to vector<2x512xbf16>
      %20 = arith.cmpf oge, %18, %19 : vector<2x512xbf16>
      %cst_15 = arith.constant 1.000980e-02 : bf16
      %21 = vector.broadcast %cst_15 : bf16 to vector<2x512xbf16>
      %22 = arith.mulf %21, %18 : vector<2x512xbf16>
      %23 = arith.select %20, %18, %22 : vector<2x512xi1>, vector<2x512xbf16>
      %c0_16 = arith.constant 0 : index
      %c0_17 = arith.constant 0 : index
      %24 = vector.load %arg5[%c0_16, %c0_17] : memref<512x128xbf16, #tpu.memory_space<vmem>>, vector<512x128xbf16>
      %cst_18 = arith.constant dense<0.000000e+00> : vector<2x128xf32>
      %25 = tpu.matmul %23, %24, %cst_18 {dimension_numbers = #tpu.dot_dimension_numbers<[1], [0], [0], [1], [0, 0, 1, 1], [], []>} : vector<2x512xbf16>, vector<512x128xbf16>, vector<2x128xf32> -> vector<2x128xf32>
      %c0_19 = arith.constant 0 : index
      %c0_20 = arith.constant 0 : index
      %26 = vector.load %arg6[%c0_19, %c0_20] : memref<1x128xf32, #tpu.memory_space<vmem>>, vector<1x128xf32>
      %27 = vector.broadcast %26 : vector<1x128xf32> to vector<2x128xf32>
      %28 = arith.addf %25, %27 : vector<2x128xf32>
      %c0_21 = arith.constant 0 : index
      %c0_22 = arith.constant 0 : index
      %29 = vector.load %arg7[%c0_21, %c0_22] : memref<2x128xf32, #tpu.memory_space<vmem>>, vector<2x128xf32>
      tpu.vector_store %arg7[%c0_21, %c0_22], %28 {strides = array<i32>} : memref<2x128xf32, #tpu.memory_space<vmem>>, vector<2x128xf32>,
    } else {
    }
    return
  }
  func.func @transform_0(%arg0: i32, %arg1: i32) -> (i32, i32) {
    %c0_i32 = arith.constant 0 : i32
    return %arg0, %arg1 : i32, i32
  }
  func.func @transform_1(%arg0: i32, %arg1: i32) -> (i32, i32) {
    %c0_i32 = arith.constant 0 : i32
    %c0_i32_0 = arith.constant 0 : i32
    return %arg1, %c0_i32 : i32, i32
  }
  func.func @transform_2(%arg0: i32, %arg1: i32) -> (i32, i32) {
    %c0_i32 = arith.constant 0 : i32
    %c0_i32_0 = arith.constant 0 : i32
    %c0_i32_1 = arith.constant 0 : i32
    return %c0_i32, %c0_i32_0 : i32, i32
  }
  func.func @transform_3(%arg0: i32, %arg1: i32) -> (i32, i32) {
    %c0_i32 = arith.constant 0 : i32
    %c0_i32_0 = arith.constant 0 : i32
    %c0_i32_1 = arith.constant 0 : i32
    return %c0_i32, %c0_i32_0 : i32, i32
  }
  func.func @transform_4(%arg0: i32, %arg1: i32) -> (i32, i32) {
    %c0_i32 = arith.constant 0 : i32
    %c0_i32_0 = arith.constant 0 : i32
    %c0_i32_1 = arith.constant 0 : i32
    return %c0_i32, %c0_i32_0 : i32, i32
  }
  func.func @transform_5(%arg0: i32, %arg1: i32) -> (i32, i32) {
    %c0_i32 = arith.constant 0 : i32
    %c0_i32_0 = arith.constant 0 : i32
    return %arg0, %c0_i32 : i32, i32
  }
}

</mosaic_0001>

<llo_original>
// kernel: tpu_custom_call.1
$region0: #{tpu_custom_call.1}
  #allocation0 [shape = 'u32[]', space=smem, size = 0x4, offset = 0x4, fixed_abs, tag = 'smem constant byte address 0x4 - core index']
  #allocation1 [shape = 'u32[144,128]{1,0:T(1,128)}', space=vmem, size = 0x12000, scoped, tag = 'internal scratch']
  #allocation2 [shape = 'f32[2,512]{1,0:T(2,128)}', space=vmem, size = 0x1000, scoped, tag = 'scratch operand']
  %s0 = inlined_call_operand.hbm [shape: f32[2,1024], index: 0, kind: input, shape index: {}]
  %s1 = inlined_call_operand.hbm [shape: bf16[1024,512], index: 1, kind: input, shape index: {}]
  %s2 = inlined_call_operand.hbm [shape: f32[1,512], index: 2, kind: input, shape index: {}]
  %s3 = inlined_call_operand.hbm [shape: bf16[512,128], index: 3, kind: input, shape index: {}]
  %s4 = inlined_call_operand.vmem [shape: f32[1,128], index: 4, kind: input, shape index: {}]
  %s5 = inlined_call_operand.hbm [shape: f32[2,128], index: 5, kind: output, shape index: {}]
  %s6 = sld [smem:[#allocation0]]
  $region54: #{tpu_custom_call.1} parent=0
    _
  %s8 = ssub.s32 1, %s6
  %s9 = scalar_select 0, %s8, %s6
  $region1: #{tpu_custom_call.1} parent=0
    #allocation3 [shape = 'u8[8192]{0}', space=vmem, size = 0x2000, scoped, tag = 'input window, operand 0, single buffered']
    #allocation4 [shape = 's32[1]{0}', space=sflag, size = 0x4, scoped, tag = 'scoped memory for tpu_custom_call.1']
    #allocation5 [shape = 's32[1]{0}', space=sflag, size = 0x4, scoped, tag = 'scoped memory for tpu_custom_call.1']
    #allocation6 [shape = 'u8[1048576]{0}', space=vmem, size = 0x100000, scoped, tag = 'input window, operand 1, single buffered']
    #allocation7 [shape = 's32[1]{0}', space=sflag, size = 0x4, scoped, tag = 'scoped memory for tpu_custom_call.1']
    #allocation8 [shape = 'u8[2048]{0}', space=vmem, size = 0x800, scoped, tag = 'input window, operand 2, single buffered']
    #allocation9 [shape = 'u8[131072]{0}', space=vmem, size = 0x20000, scoped, tag = 'input window, operand 3, single buffered']
    #allocation10 [shape = 's32[1]{0}', space=sflag, size = 0x4, scoped, tag = 'scoped memory for tpu_custom_call.1']
    #allocation11 [shape = 'u8[1024]{0}', space=vmem, size = 0x400, scoped, tag = 'output window, operand 0, single buffered']
    %10 = vsyncpa [#allocation4], 0
    %11 = vsyncpa [#allocation7], 0
    %12 = vsyncpa [#allocation10], 0
    %13 = vsyncpa [#allocation5], 0
    // Predicated region
    $region2: #{tpu_custom_call.1} parent=1 // pred_check
      _
    $region3: #{tpu_custom_call.1} parent=1 // pred_check_branch
      %15 = sbr.rel (0) target = $region5
    $region4: #{tpu_custom_call.1} parent=1 // pred_region
      %s17 = ssub.s32 256, 256
      %18 = vsyncadd [#allocation4], %s17
      %s20 = sshll.u32 [#allocation3], 4
      %s21 = int_to_ptr.vmem [resolvable:$true] %s20
      %23 = dma.hbm_to_vmem [thread:$0]  %s0, 256, %s21, [#allocation4]
    $region5: #{tpu_custom_call.1} parent=1 // pred_fallthru
      _
    // Predicated region
    $region6: #{tpu_custom_call.1} parent=1 // pred_check
      _
    $region7: #{tpu_custom_call.1} parent=1 // pred_check_branch
      %25 = sbr.rel (0) target = $region9
    $region8: #{tpu_custom_call.1} parent=1 // pred_region
      %s27 = ssub.s32 32768, 32768
      %28 = vsyncadd [#allocation7], %s27
      %s29 = sshll.u32 [#allocation6], 4
      %s30 = int_to_ptr.vmem [resolvable:$true] %s29
      %35 = dma.hbm_to_vmem [thread:$0]  %s1, 32768, %s30, [#allocation7], 256, 256, 16
    $region9: #{tpu_custom_call.1} parent=1 // pred_fallthru
      _
    // Predicated region
    $region10: #{tpu_custom_call.1} parent=1 // pred_check
      _
    $region11: #{tpu_custom_call.1} parent=1 // pred_check_branch
      %37 = sbr.rel (0) target = $region13
    $region12: #{tpu_custom_call.1} parent=1 // pred_region
      %s39 = ssub.s32 64, 64
      %40 = vsyncadd [#allocation7], %s39
      %s42 = sshll.u32 [#allocation8], 4
      %s43 = int_to_ptr.vmem [resolvable:$true] %s42
      %45 = dma.hbm_to_vmem [thread:$0]  %s2, 64, %s43, [#allocation7]
    $region13: #{tpu_custom_call.1} parent=1 // pred_fallthru
      _
    // Predicated region
    $region14: #{tpu_custom_call.1} parent=1 // pred_check
      _
    $region15: #{tpu_custom_call.1} parent=1 // pred_check_branch
      %47 = sbr.rel (0) target = $region17
    $region16: #{tpu_custom_call.1} parent=1 // pred_region
      %s49 = ssub.s32 4096, 4096
      %50 = vsyncadd [#allocation10], %s49
      %s51 = sshll.u32 [#allocation9], 4
      %s52 = int_to_ptr.vmem [resolvable:$true] %s51
      %57 = dma.hbm_to_vmem [thread:$0]  %s3, 4096, %s52, [#allocation10], 64, 64, 4
    $region17: #{tpu_custom_call.1} parent=1 // pred_fallthru
      _
    // Predicated region
    $region18: #{tpu_custom_call.1} parent=1 // pred_check
      _
    $region19: #{tpu_custom_call.1} parent=1 // pred_check_branch
      %59 = sbr.rel (0) target = $region21
    $region20: #{tpu_custom_call.1} parent=1 // pred_region
      _
    $region21: #{tpu_custom_call.1} parent=1 // pred_fallthru
      _
    // Predicated region
    $region22: #{tpu_custom_call.1} parent=1 // pred_check
      _
    $region23: #{tpu_custom_call.1} parent=1 // pred_check_branch
      %61 = sbr.rel (0) target = $region25
    $region24: #{tpu_custom_call.1} parent=1 // pred_region
      %62 = dma.done [#allocation4], 256
    $region25: #{tpu_custom_call.1} parent=1 // pred_fallthru
      _
    // Predicated region
    $region26: #{tpu_custom_call.1} parent=1 // pred_check
      _
    $region27: #{tpu_custom_call.1} parent=1 // pred_check_branch
      %64 = sbr.rel (0) target = $region29
    $region28: #{tpu_custom_call.1} parent=1 // pred_region
      %65 = dma.done [#allocation7], 32768
    $region29: #{tpu_custom_call.1} parent=1 // pred_fallthru
      _
    // Predicated region
    $region30: #{tpu_custom_call.1} parent=1 // pred_check
      _
    $region31: #{tpu_custom_call.1} parent=1 // pred_check_branch
      %67 = sbr.rel (0) target = $region33
    $region32: #{tpu_custom_call.1} parent=1 // pred_region
      %68 = dma.done [#allocation7], 64
    $region33: #{tpu_custom_call.1} parent=1 // pred_fallthru
      _
    // Predicated region
    $region34: #{tpu_custom_call.1} parent=1 // pred_check
      _
    $region35: #{tpu_custom_call.1} parent=1 // pred_check_branch
      %70 = sbr.rel (0) target = $region37
    $region36: #{tpu_custom_call.1} parent=1 // pred_region
      %71 = dma.done [#allocation10], 4096
    $region37: #{tpu_custom_call.1} parent=1 // pred_fallthru
      _
    %p74 = scmp.eq.s32.totalorder 0, 0
    // Predicated region
    $region38: #{tpu_custom_call.1} parent=1 // pred_check
      %p75 = pneg %p74
    $region39: #{tpu_custom_call.1} parent=1 // pred_check_branch
      %77 = sbr.rel (%p75) target = $region41
    $region40: #{tpu_custom_call.1} parent=1 // pred_region
      %78 = vst [vmem:[#allocation2] sm:$0xff] 0.0
    $region41: #{tpu_custom_call.1} parent=1 // pred_fallthru
      _
    %v79 = vld [vmem:[#allocation2] sm:$0xff]
    %v80 = vld [vmem:[#allocation3] sm:$0xff]
    %v81 = vld [vmem:[#allocation3 + $0x8] sm:$0xff]
    %v84 = vcombine.high %v80, %v80
    %v86 = vunpack.c.l.s4 1983009808
    %v87 = vunpack.c.0.s8 %v86
    %v88 = vlaneseq
    %v89 = vshrl.u32 %v88, 7
    %v90 = vsub.s32 %v87, %v89
    %v91 = vrot.slane %v80, %v90
    %v93 = vunpack.c.l.s4 1983009808
    %v94 = vunpack.c.0.s8 %v93
    %v95 = vlaneseq
    %v96 = vshrl.u32 %v95, 7
    %v97 = vsub.s32 %v94, %v96
    %v98 = vrot.slane %v84, %v97
    %v99 = vcombine.high %v91, %v91
    %v100 = vcombine.high %v98, %v98
    %v101 = vcombine.high %v81, %v81
    %v103 = vunpack.c.l.s4 1983009808
    %v104 = vunpack.c.0.s8 %v103
    %v105 = vlaneseq
    %v106 = vshrl.u32 %v105, 7
    %v107 = vsub.s32 %v104, %v106
    %v108 = vrot.slane %v81, %v107
    %v110 = vunpack.c.l.s4 1983009808
    %v111 = vunpack.c.0.s8 %v110
    %v112 = vlaneseq
    %v113 = vshrl.u32 %v112, 7
    %v114 = vsub.s32 %v111, %v113
    %v115 = vrot.slane %v101, %v114
    %v116 = vcombine.high %v108, %v108
    %v117 = vcombine.high %v115, %v115
    %v126 = vpack.c.bf16 %v91, %v91
    %v127 = vpack.c.bf16 %v99, %v99
    %v128 = vpack.c.bf16 %v98, %v98
    %v129 = vpack.c.bf16 %v100, %v100
    %v130 = vpack.c.bf16 %v108, %v108
    %v131 = vpack.c.bf16 %v116, %v116
    %v132 = vpack.c.bf16 %v115, %v115
    %v133 = vpack.c.bf16 %v117, %v117
    %v134 = vld [vmem:[#allocation6] sm:$0xff]
    %v135 = vld [vmem:[#allocation6 + $0x8] sm:$0xff]
    %v136 = vld [vmem:[#allocation6 + $0x10] sm:$0xff]
    %v137 = vld [vmem:[#allocation6 + $0x18] sm:$0xff]
    %v138 = vld [vmem:[#allocation6 + $0x20] sm:$0xff]
    %v139 = vld [vmem:[#allocation6 + $0x28] sm:$0xff]
    %v140 = vld [vmem:[#allocation6 + $0x30] sm:$0xff]
    %v141 = vld [vmem:[#allocation6 + $0x38] sm:$0xff]
    %v142 = vld [vmem:[#allocation6 + $0x40] sm:$0xff]
    %v143 = vld [vmem:[#allocation6 + $0x48] sm:$0xff]
    %v144 = vld [vmem:[#allocation6 + $0x50] sm:$0xff]
    %v145 = vld [vmem:[#allocation6 + $0x58] sm:$0xff]
    %v146 = vld [vmem:[#allocation6 + $0x60] sm:$0xff]
    %v147 = vld [vmem:[#allocation6 + $0x68] sm:$0xff]
    %v148 = vld [vmem:[#allocation6 + $0x70] sm:$0xff]
    %v149 = vld [vmem:[#allocation6 + $0x78] sm:$0xff]
    %v150 = vld [vmem:[#allocation6 + $0x80] sm:$0xff]
    %v151 = vld [vmem:[#allocation6 + $0x88] sm:$0xff]
    %v152 = vld [vmem:[#allocation6 + $0x90] sm:$0xff]
    %v153 = vld [vmem:[#allocation6 + $0x98] sm:$0xff]
    %v154 = vld [vmem:[#allocation6 + $0xa0] sm:$0xff]
    %v155 = vld [vmem:[#allocation6 + $0xa8] sm:$0xff]
    %v156 = vld [vmem:[#allocation6 + $0xb0] sm:$0xff]
    %v157 = vld [vmem:[#allocation6 + $0xb8] sm:$0xff]
    %v158 = vld [vmem:[#allocation6 + $0xc0] sm:$0xff]
    %v159 = vld [vmem:[#allocation6 + $0xc8] sm:$0xff]
    %v160 = vld [vmem:[#allocation6 + $0xd0] sm:$0xff]
    %v161 = vld [vmem:[#allocation6 + $0xd8] sm:$0xff]
    %v162 = vld [vmem:[#allocation6 + $0xe0] sm:$0xff]
    %v163 = vld [vmem:[#allocation6 + $0xe8] sm:$0xff]
    %v164 = vld [vmem:[#allocation6 + $0xf0] sm:$0xff]
    %v165 = vld [vmem:[#allocation6 + $0xf8] sm:$0xff]
    %v166 = vld [vmem:[#allocation6 + $0x100] sm:$0xff]
    %v167 = vld [vmem:[#allocation6 + $0x108] sm:$0xff]
    %v168 = vld [vmem:[#allocation6 + $0x110] sm:$0xff]
    %v169 = vld [vmem:[#allocation6 + $0x118] sm:$0xff]
    %v170 = vld [vmem:[#allocation6 + $0x120] sm:$0xff]
    %v171 = vld [vmem:[#allocation6 + $0x128] sm:$0xff]
    %v172 = vld [vmem:[#allocation6 + $0x130] sm:$0xff]
    %v173 = vld [vmem:[#allocation6 + $0x138] sm:$0xff]
    %v174 = vld [vmem:[#allocation6 + $0x140] sm:$0xff]
    %v175 = vld [vmem:[#allocation6 + $0x148] sm:$0xff]
    %v176 = vld [vmem:[#allocation6 + $0x150] sm:$0xff]
    %v177 = vld [vmem:[#allocation6 + $0x158] sm:$0xff]
    %v178 = vld [vmem:[#allocation6 + $0x160] sm:$0xff]
    %v179 = vld [vmem:[#allocation6 + $0x168] sm:$0xff]
    %v180 = vld [vmem:[#allocation6 + $0x170] sm:$0xff]
    %v181 = vld [vmem:[#allocation6 + $0x178] sm:$0xff]
    %v182 = vld [vmem:[#allocation6 + $0x180] sm:$0xff]
    %v183 = vld [vmem:[#allocation6 + $0x188] sm:$0xff]
    %v184 = vld [vmem:[#allocation6 + $0x190] sm:$0xff]
    %v185 = vld [vmem:[#allocation6 + $0x198] sm:$0xff]
    %v186 = vld [vmem:[#allocation6 + $0x1a0] sm:$0xff]
    %v187 = vld [vmem:[#allocation6 + $0x1a8] sm:$0xff]
    %v188 = vld [vmem:[#allocation6 + $0x1b0] sm:$0xff]
    %v189 = vld [vmem:[#allocation6 + $0x1b8] sm:$0xff]
    %v190 = vld [vmem:[#allocation6 + $0x1c0] sm:$0xff]
    %v191 = vld [vmem:[#allocation6 + $0x1c8] sm:$0xff]
    %v192 = vld [vmem:[#allocation6 + $0x1d0] sm:$0xff]
    %v193 = vld [vmem:[#allocation6 + $0x1d8] sm:$0xff]
    %v194 = vld [vmem:[#allocation6 + $0x1e0] sm:$0xff]
    %v195 = vld [vmem:[#allocation6 + $0x1e8] sm:$0xff]
    %v196 = vld [vmem:[#allocation6 + $0x1f0] sm:$0xff]
    %v197 = vld [vmem:[#allocation6 + $0x1f8] sm:$0xff]
    %v198 = vld [vmem:[#allocation6 + $0x200] sm:$0xff]
    %v199 = vld [vmem:[#allocation6 + $0x208] sm:$0xff]
    %v200 = vld [vmem:[#allocation6 + $0x210] sm:$0xff]
    %v201 = vld [vmem:[#allocation6 + $0x218] sm:$0xff]
    %v202 = vld [vmem:[#allocation6 + $0x220] sm:$0xff]
    %v203 = vld [vmem:[#allocation6 + $0x228] sm:$0xff]
    %v204 = vld [vmem:[#allocation6 + $0x230] sm:$0xff]
    %v205 = vld [vmem:[#allocation6 + $0x238] sm:$0xff]
    %v206 = vld [vmem:[#allocation6 + $0x240] sm:$0xff]
    %v207 = vld [vmem:[#allocation6 + $0x248] sm:$0xff]
    %v208 = vld [vmem:[#allocation6 + $0x250] sm:$0xff]
    %v209 = vld [vmem:[#allocation6 + $0x258] sm:$0xff]
    %v210 = vld [vmem:[#allocation6 + $0x260] sm:$0xff]
    %v211 = vld [vmem:[#allocation6 + $0x268] sm:$0xff]
    %v212 = vld [vmem:[#allocation6 + $0x270] sm:$0xff]
    %v213 = vld [vmem:[#allocation6 + $0x278] sm:$0xff]
    %v214 = vld [vmem:[#allocation6 + $0x280] sm:$0xff]
    %v215 = vld [vmem:[#allocation6 + $0x288] sm:$0xff]
    %v216 = vld [vmem:[#allocation6 + $0x290] sm:$0xff]
    %v217 = vld [vmem:[#allocation6 + $0x298] sm:$0xff]
    %v218 = vld [vmem:[#allocation6 + $0x2a0] sm:$0xff]
    %v219 = vld [vmem:[#allocation6 + $0x2a8] sm:$0xff]
    %v220 = vld [vmem:[#allocation6 + $0x2b0] sm:$0xff]
    %v221 = vld [vmem:[#allocation6 + $0x2b8] sm:$0xff]
    %v222 = vld [vmem:[#allocation6 + $0x2c0] sm:$0xff]
    %v223 = vld [vmem:[#allocation6 + $0x2c8] sm:$0xff]
    %v224 = vld [vmem:[#allocation6 + $0x2d0] sm:$0xff]
    %v225 = vld [vmem:[#allocation6 + $0x2d8] sm:$0xff]
    %v226 = vld [vmem:[#allocation6 + $0x2e0] sm:$0xff]
    %v227 = vld [vmem:[#allocation6 + $0x2e8] sm:$0xff]
    %v228 = vld [vmem:[#allocation6 + $0x2f0] sm:$0xff]
    %v229 = vld [vmem:[#allocation6 + $0x2f8] sm:$0xff]
    %v230 = vld [vmem:[#allocation6 + $0x300] sm:$0xff]
    %v231 = vld [vmem:[#allocation6 + $0x308] sm:$0xff]
    %v232 = vld [vmem:[#allocation6 + $0x310] sm:$0xff]
    %v233 = vld [vmem:[#allocation6 + $0x318] sm:$0xff]
    %v234 = vld [vmem:[#allocation6 + $0x320] sm:$0xff]
    %v235 = vld [vmem:[#allocation6 + $0x328] sm:$0xff]
    %v236 = vld [vmem:[#allocation6 + $0x330] sm:$0xff]
    %v237 = vld [vmem:[#allocation6 + $0x338] sm:$0xff]
    %v238 = vld [vmem:[#allocation6 + $0x340] sm:$0xff]
    %v239 = vld [vmem:[#allocation6 + $0x348] sm:$0xff]
    %v240 = vld [vmem:[#allocation6 + $0x350] sm:$0xff]
    %v241 = vld [vmem:[#allocation6 + $0x358] sm:$0xff]
    %v242 = vld [vmem:[#allocation6 + $0x360] sm:$0xff]
    %v243 = vld [vmem:[#allocation6 + $0x368] sm:$0xff]
    %v244 = vld [vmem:[#allocation6 + $0x370] sm:$0xff]
    %v245 = vld [vmem:[#allocation6 + $0x378] sm:$0xff]
    %v246 = vld [vmem:[#allocation6 + $0x380] sm:$0xff]
    %v247 = vld [vmem:[#allocation6 + $0x388] sm:$0xff]
    %v248 = vld [vmem:[#allocation6 + $0x390] sm:$0xff]
    %v249 = vld [vmem:[#allocation6 + $0x398] sm:$0xff]
    %v250 = vld [vmem:[#allocation6 + $0x3a0] sm:$0xff]
    %v251 = vld [vmem:[#allocation6 + $0x3a8] sm:$0xff]
    %v252 = vld [vmem:[#allocation6 + $0x3b0] sm:$0xff]
    %v253 = vld [vmem:[#allocation6 + $0x3b8] sm:$0xff]
    %v254 = vld [vmem:[#allocation6 + $0x3c0] sm:$0xff]
    %v255 = vld [vmem:[#allocation6 + $0x3c8] sm:$0xff]
    %v256 = vld [vmem:[#allocation6 + $0x3d0] sm:$0xff]
    %v257 = vld [vmem:[#allocation6 + $0x3d8] sm:$0xff]
    %v258 = vld [vmem:[#allocation6 + $0x3e0] sm:$0xff]
    %v259 = vld [vmem:[#allocation6 + $0x3e8] sm:$0xff]
    %v260 = vld [vmem:[#allocation6 + $0x3f0] sm:$0xff]
    %v261 = vld [vmem:[#allocation6 + $0x3f8] sm:$0xff]
    %v262 = vld [vmem:[#allocation6 + $0x400] sm:$0xff]
    %v263 = vld [vmem:[#allocation6 + $0x408] sm:$0xff]
    %v264 = vld [vmem:[#allocation6 + $0x410] sm:$0xff]
    %v265 = vld [vmem:[#allocation6 + $0x418] sm:$0xff]
    %v266 = vld [vmem:[#allocation6 + $0x420] sm:$0xff]
    %v267 = vld [vmem:[#allocation6 + $0x428] sm:$0xff]
    %v268 = vld [vmem:[#allocation6 + $0x430] sm:$0xff]
    %v269 = vld [vmem:[#allocation6 + $0x438] sm:$0xff]
    %v270 = vld [vmem:[#allocation6 + $0x440] sm:$0xff]
    %v271 = vld [vmem:[#allocation6 + $0x448] sm:$0xff]
    %v272 = vld [vmem:[#allocation6 + $0x450] sm:$0xff]
    %v273 = vld [vmem:[#allocation6 + $0x458] sm:$0xff]
    %v274 = vld [vmem:[#allocation6 + $0x460] sm:$0xff]
    %v275 = vld [vmem:[#allocation6 + $0x468] sm:$0xff]
    %v276 = vld [vmem:[#allocation6 + $0x470] sm:$0xff]
    %v277 = vld [vmem:[#allocation6 + $0x478] sm:$0xff]
    %v278 = vld [vmem:[#allocation6 + $0x480] sm:$0xff]
    %v279 = vld [vmem:[#allocation6 + $0x488] sm:$0xff]
    %v280 = vld [vmem:[#allocation6 + $0x490] sm:$0xff]
    %v281 = vld [vmem:[#allocation6 + $0x498] sm:$0xff]
    %v282 = vld [vmem:[#allocation6 + $0x4a0] sm:$0xff]
    %v283 = vld [vmem:[#allocation6 + $0x4a8] sm:$0xff]
    %v284 = vld [vmem:[#allocation6 + $0x4b0] sm:$0xff]
    %v285 = vld [vmem:[#allocation6 + $0x4b8] sm:$0xff]
    %v286 = vld [vmem:[#allocation6 + $0x4c0] sm:$0xff]
    %v287 = vld [vmem:[#allocation6 + $0x4c8] sm:$0xff]
    %v288 = vld [vmem:[#allocation6 + $0x4d0] sm:$0xff]
    %v289 = vld [vmem:[#allocation6 + $0x4d8] sm:$0xff]
    %v290 = vld [vmem:[#allocation6 + $0x4e0] sm:$0xff]
    %v291 = vld [vmem:[#allocation6 + $0x4e8] sm:$0xff]
    %v292 = vld [vmem:[#allocation6 + $0x4f0] sm:$0xff]
    %v293 = vld [vmem:[#allocation6 + $0x4f8] sm:$0xff]
    %v294 = vld [vmem:[#allocation6 + $0x500] sm:$0xff]
    %v295 = vld [vmem:[#allocation6 + $0x508] sm:$0xff]
    %v296 = vld [vmem:[#allocation6 + $0x510] sm:$0xff]
    %v297 = vld [vmem:[#allocation6 + $0x518] sm:$0xff]
    %v298 = vld [vmem:[#allocation6 + $0x520] sm:$0xff]
    %v299 = vld [vmem:[#allocation6 + $0x528] sm:$0xff]
    %v300 = vld [vmem:[#allocation6 + $0x530] sm:$0xff]
    %v301 = vld [vmem:[#allocation6 + $0x538] sm:$0xff]
    %v302 = vld [vmem:[#allocation6 + $0x540] sm:$0xff]
    %v303 = vld [vmem:[#allocation6 + $0x548] sm:$0xff]
    %v304 = vld [vmem:[#allocation6 + $0x550] sm:$0xff]
    %v305 = vld [vmem:[#allocation6 + $0x558] sm:$0xff]
    %v306 = vld [vmem:[#allocation6 + $0x560] sm:$0xff]
    %v307 = vld [vmem:[#allocation6 + $0x568] sm:$0xff]
    %v308 = vld [vmem:[#allocation6 + $0x570] sm:$0xff]
    %v309 = vld [vmem:[#allocation6 + $0x578] sm:$0xff]
    %v310 = vld [vmem:[#allocation6 + $0x580] sm:$0xff]
    %v311 = vld [vmem:[#allocation6 + $0x588] sm:$0xff]
    %v312 = vld [vmem:[#allocation6 + $0x590] sm:$0xff]
    %v313 = vld [vmem:[#allocation6 + $0x598] sm:$0xff]
    %v314 = vld [vmem:[#allocation6 + $0x5a0] sm:$0xff]
    %v315 = vld [vmem:[#allocation6 + $0x5a8] sm:$0xff]
    %v316 = vld [vmem:[#allocation6 + $0x5b0] sm:$0xff]
    %v317 = vld [vmem:[#allocation6 + $0x5b8] sm:$0xff]
    %v318 = vld [vmem:[#allocation6 + $0x5c0] sm:$0xff]
    %v319 = vld [vmem:[#allocation6 + $0x5c8] sm:$0xff]
    %v320 = vld [vmem:[#allocation6 + $0x5d0] sm:$0xff]
    %v321 = vld [vmem:[#allocation6 + $0x5d8] sm:$0xff]
    %v322 = vld [vmem:[#allocation6 + $0x5e0] sm:$0xff]
    %v323 = vld [vmem:[#allocation6 + $0x5e8] sm:$0xff]
    %v324 = vld [vmem:[#allocation6 + $0x5f0] sm:$0xff]
    %v325 = vld [vmem:[#allocation6 + $0x5f8] sm:$0xff]
    %v326 = vld [vmem:[#allocation6 + $0x600] sm:$0xff]
    %v327 = vld [vmem:[#allocation6 + $0x608] sm:$0xff]
    %v328 = vld [vmem:[#allocation6 + $0x610] sm:$0xff]
    %v329 = vld [vmem:[#allocation6 + $0x618] sm:$0xff]
    %v330 = vld [vmem:[#allocation6 + $0x620] sm:$0xff]
    %v331 = vld [vmem:[#allocation6 + $0x628] sm:$0xff]
    %v332 = vld [vmem:[#allocation6 + $0x630] sm:$0xff]
    %v333 = vld [vmem:[#allocation6 + $0x638] sm:$0xff]
    %v334 = vld [vmem:[#allocation6 + $0x640] sm:$0xff]
    %v335 = vld [vmem:[#allocation6 + $0x648] sm:$0xff]
    %v336 = vld [vmem:[#allocation6 + $0x650] sm:$0xff]
    %v337 = vld [vmem:[#allocation6 + $0x658] sm:$0xff]
    %v338 = vld [vmem:[#allocation6 + $0x660] sm:$0xff]
    %v339 = vld [vmem:[#allocation6 + $0x668] sm:$0xff]
    %v340 = vld [vmem:[#allocation6 + $0x670] sm:$0xff]
    %v341 = vld [vmem:[#allocation6 + $0x678] sm:$0xff]
    %v342 = vld [vmem:[#allocation6 + $0x680] sm:$0xff]
    %v343 = vld [vmem:[#allocation6 + $0x688] sm:$0xff]
    %v344 = vld [vmem:[#allocation6 + $0x690] sm:$0xff]
    %v345 = vld [vmem:[#allocation6 + $0x698] sm:$0xff]
    %v346 = vld [vmem:[#allocation6 + $0x6a0] sm:$0xff]
    %v347 = vld [vmem:[#allocation6 + $0x6a8] sm:$0xff]
    %v348 = vld [vmem:[#allocation6 + $0x6b0] sm:$0xff]
    %v349 = vld [vmem:[#allocation6 + $0x6b8] sm:$0xff]
    %v350 = vld [vmem:[#allocation6 + $0x6c0] sm:$0xff]
    %v351 = vld [vmem:[#allocation6 + $0x6c8] sm:$0xff]
    %v352 = vld [vmem:[#allocation6 + $0x6d0] sm:$0xff]
    %v353 = vld [vmem:[#allocation6 + $0x6d8] sm:$0xff]
    %v354 = vld [vmem:[#allocation6 + $0x6e0] sm:$0xff]
    %v355 = vld [vmem:[#allocation6 + $0x6e8] sm:$0xff]
    %v356 = vld [vmem:[#allocation6 + $0x6f0] sm:$0xff]
    %v357 = vld [vmem:[#allocation6 + $0x6f8] sm:$0xff]
    %v358 = vld [vmem:[#allocation6 + $0x700] sm:$0xff]
    %v359 = vld [vmem:[#allocation6 + $0x708] sm:$0xff]
    %v360 = vld [vmem:[#allocation6 + $0x710] sm:$0xff]
    %v361 = vld [vmem:[#allocation6 + $0x718] sm:$0xff]
    %v362 = vld [vmem:[#allocation6 + $0x720] sm:$0xff]
    %v363 = vld [vmem:[#allocation6 + $0x728] sm:$0xff]
    %v364 = vld [vmem:[#allocation6 + $0x730] sm:$0xff]
    %v365 = vld [vmem:[#allocation6 + $0x738] sm:$0xff]
    %v366 = vld [vmem:[#allocation6 + $0x740] sm:$0xff]
    %v367 = vld [vmem:[#allocation6 + $0x748] sm:$0xff]
    %v368 = vld [vmem:[#allocation6 + $0x750] sm:$0xff]
    %v369 = vld [vmem:[#allocation6 + $0x758] sm:$0xff]
    %v370 = vld [vmem:[#allocation6 + $0x760] sm:$0xff]
    %v371 = vld [vmem:[#allocation6 + $0x768] sm:$0xff]
    %v372 = vld [vmem:[#allocation6 + $0x770] sm:$0xff]
    %v373 = vld [vmem:[#allocation6 + $0x778] sm:$0xff]
    %v374 = vld [vmem:[#allocation6 + $0x780] sm:$0xff]
    %v375 = vld [vmem:[#allocation6 + $0x788] sm:$0xff]
    %v376 = vld [vmem:[#allocation6 + $0x790] sm:$0xff]
    %v377 = vld [vmem:[#allocation6 + $0x798] sm:$0xff]
    %v378 = vld [vmem:[#allocation6 + $0x7a0] sm:$0xff]
    %v379 = vld [vmem:[#allocation6 + $0x7a8] sm:$0xff]
    %v380 = vld [vmem:[#allocation6 + $0x7b0] sm:$0xff]
    %v381 = vld [vmem:[#allocation6 + $0x7b8] sm:$0xff]
    %v382 = vld [vmem:[#allocation6 + $0x7c0] sm:$0xff]
    %v383 = vld [vmem:[#allocation6 + $0x7c8] sm:$0xff]
    %v384 = vld [vmem:[#allocation6 + $0x7d0] sm:$0xff]
    %v385 = vld [vmem:[#allocation6 + $0x7d8] sm:$0xff]
    %v386 = vld [vmem:[#allocation6 + $0x7e0] sm:$0xff]
    %v387 = vld [vmem:[#allocation6 + $0x7e8] sm:$0xff]
    %v388 = vld [vmem:[#allocation6 + $0x7f0] sm:$0xff]
    %v389 = vld [vmem:[#allocation6 + $0x7f8] sm:$0xff]
    %v646 = vunpack.c.l.b16 %v134
    %v647 = vunpack.c.h.b16 %v134
    %v648 = vunpack.c.l.b16 %v135
    %v649 = vunpack.c.h.b16 %v135
    %v650 = vunpack.c.l.b16 %v136
    %v651 = vunpack.c.h.b16 %v136
    %v652 = vunpack.c.l.b16 %v137
    %v653 = vunpack.c.h.b16 %v137
    %v654 = vunpack.c.l.b16 %v138
    %v655 = vunpack.c.h.b16 %v138
    %v656 = vunpack.c.l.b16 %v139
    %v657 = vunpack.c.h.b16 %v139
    %v658 = vunpack.c.l.b16 %v140
    %v659 = vunpack.c.h.b16 %v140
    %v660 = vunpack.c.l.b16 %v141
    %v661 = vunpack.c.h.b16 %v141
    %v662 = vunpack.c.l.b16 %v142
    %v663 = vunpack.c.h.b16 %v142
    %v664 = vunpack.c.l.b16 %v143
    %v665 = vunpack.c.h.b16 %v143
    %v666 = vunpack.c.l.b16 %v144
    %v667 = vunpack.c.h.b16 %v144
    %v668 = vunpack.c.l.b16 %v145
    %v669 = vunpack.c.h.b16 %v145
    %v670 = vunpack.c.l.b16 %v146
    %v671 = vunpack.c.h.b16 %v146
    %v672 = vunpack.c.l.b16 %v147
    %v673 = vunpack.c.h.b16 %v147
    %v674 = vunpack.c.l.b16 %v148
    %v675 = vunpack.c.h.b16 %v148
    %v676 = vunpack.c.l.b16 %v149
    %v677 = vunpack.c.h.b16 %v149
    %v678 = vunpack.c.l.b16 %v150
    %v679 = vunpack.c.h.b16 %v150
    %v680 = vunpack.c.l.b16 %v151
    %v681 = vunpack.c.h.b16 %v151
    %v682 = vunpack.c.l.b16 %v152
    %v683 = vunpack.c.h.b16 %v152
    %v684 = vunpack.c.l.b16 %v153
    %v685 = vunpack.c.h.b16 %v153
    %v686 = vunpack.c.l.b16 %v154
    %v687 = vunpack.c.h.b16 %v154
    %v688 = vunpack.c.l.b16 %v155
    %v689 = vunpack.c.h.b16 %v155
    %v690 = vunpack.c.l.b16 %v156
    %v691 = vunpack.c.h.b16 %v156
    %v692 = vunpack.c.l.b16 %v157
    %v693 = vunpack.c.h.b16 %v157
    %v694 = vunpack.c.l.b16 %v158
    %v695 = vunpack.c.h.b16 %v158
    %v696 = vunpack.c.l.b16 %v159
    %v697 = vunpack.c.h.b16 %v159
    %v698 = vunpack.c.l.b16 %v160
    %v699 = vunpack.c.h.b16 %v160
    %v700 = vunpack.c.l.b16 %v161
    %v701 = vunpack.c.h.b16 %v161
    %v702 = vunpack.c.l.b16 %v162
    %v703 = vunpack.c.h.b16 %v162
    %v704 = vunpack.c.l.b16 %v163
    %v705 = vunpack.c.h.b16 %v163
    %v706 = vunpack.c.l.b16 %v164
    %v707 = vunpack.c.h.b16 %v164
    %v708 = vunpack.c.l.b16 %v165
    %v709 = vunpack.c.h.b16 %v165
    %v710 = vunpack.c.l.b16 %v166
    %v711 = vunpack.c.h.b16 %v166
    %v712 = vunpack.c.l.b16 %v167
    %v713 = vunpack.c.h.b16 %v167
    %v714 = vunpack.c.l.b16 %v168
    %v715 = vunpack.c.h.b16 %v168
    %v716 = vunpack.c.l.b16 %v169
    %v717 = vunpack.c.h.b16 %v169
    %v718 = vunpack.c.l.b16 %v170
    %v719 = vunpack.c.h.b16 %v170
    %v720 = vunpack.c.l.b16 %v171
    %v721 = vunpack.c.h.b16 %v171
    %v722 = vunpack.c.l.b16 %v172
    %v723 = vunpack.c.h.b16 %v172
    %v724 = vunpack.c.l.b16 %v173
    %v725 = vunpack.c.h.b16 %v173
    %v726 = vunpack.c.l.b16 %v174
    %v727 = vunpack.c.h.b16 %v174
    %v728 = vunpack.c.l.b16 %v175
    %v729 = vunpack.c.h.b16 %v175
    %v730 = vunpack.c.l.b16 %v176
    %v731 = vunpack.c.h.b16 %v176
    %v732 = vunpack.c.l.b16 %v177
    %v733 = vunpack.c.h.b16 %v177
    %v734 = vunpack.c.l.b16 %v178
    %v735 = vunpack.c.h.b16 %v178
    %v736 = vunpack.c.l.b16 %v179
    %v737 = vunpack.c.h.b16 %v179
    %v738 = vunpack.c.l.b16 %v180
    %v739 = vunpack.c.h.b16 %v180
    %v740 = vunpack.c.l.b16 %v181
    %v741 = vunpack.c.h.b16 %v181
    %v742 = vunpack.c.l.b16 %v182
    %v743 = vunpack.c.h.b16 %v182
    %v744 = vunpack.c.l.b16 %v183
    %v745 = vunpack.c.h.b16 %v183
    %v746 = vunpack.c.l.b16 %v184
    %v747 = vunpack.c.h.b16 %v184
    %v748 = vunpack.c.l.b16 %v185
    %v749 = vunpack.c.h.b16 %v185
    %v750 = vunpack.c.l.b16 %v186
    %v751 = vunpack.c.h.b16 %v186
    %v752 = vunpack.c.l.b16 %v187
    %v753 = vunpack.c.h.b16 %v187
    %v754 = vunpack.c.l.b16 %v188
    %v755 = vunpack.c.h.b16 %v188
    %v756 = vunpack.c.l.b16 %v189
    %v757 = vunpack.c.h.b16 %v189
    %v758 = vunpack.c.l.b16 %v190
    %v759 = vunpack.c.h.b16 %v190
    %v760 = vunpack.c.l.b16 %v191
    %v761 = vunpack.c.h.b16 %v191
    %v762 = vunpack.c.l.b16 %v192
    %v763 = vunpack.c.h.b16 %v192
    %v764 = vunpack.c.l.b16 %v193
    %v765 = vunpack.c.h.b16 %v193
    %v766 = vunpack.c.l.b16 %v194
    %v767 = vunpack.c.h.b16 %v194
    %v768 = vunpack.c.l.b16 %v195
    %v769 = vunpack.c.h.b16 %v195
    %v770 = vunpack.c.l.b16 %v196
    %v771 = vunpack.c.h.b16 %v196
    %v772 = vunpack.c.l.b16 %v197
    %v773 = vunpack.c.h.b16 %v197
    %v774 = vunpack.c.l.b16 %v198
    %v775 = vunpack.c.h.b16 %v198
    %v776 = vunpack.c.l.b16 %v199
    %v777 = vunpack.c.h.b16 %v199
    %v778 = vunpack.c.l.b16 %v200
    %v779 = vunpack.c.h.b16 %v200
    %v780 = vunpack.c.l.b16 %v201
    %v781 = vunpack.c.h.b16 %v201
    %v782 = vunpack.c.l.b16 %v202
    %v783 = vunpack.c.h.b16 %v202
    %v784 = vunpack.c.l.b16 %v203
    %v785 = vunpack.c.h.b16 %v203
    %v786 = vunpack.c.l.b16 %v204
    %v787 = vunpack.c.h.b16 %v204
    %v788 = vunpack.c.l.b16 %v205
    %v789 = vunpack.c.h.b16 %v205
    %v790 = vunpack.c.l.b16 %v206
    %v791 = vunpack.c.h.b16 %v206
    %v792 = vunpack.c.l.b16 %v207
    %v793 = vunpack.c.h.b16 %v207
    %v794 = vunpack.c.l.b16 %v208
    %v795 = vunpack.c.h.b16 %v208
    %v796 = vunpack.c.l.b16 %v209
    %v797 = vunpack.c.h.b16 %v209
    %v798 = vunpack.c.l.b16 %v210
    %v799 = vunpack.c.h.b16 %v210
    %v800 = vunpack.c.l.b16 %v211
    %v801 = vunpack.c.h.b16 %v211
    %v802 = vunpack.c.l.b16 %v212
    %v803 = vunpack.c.h.b16 %v212
    %v804 = vunpack.c.l.b16 %v213
    %v805 = vunpack.c.h.b16 %v213
    %v806 = vunpack.c.l.b16 %v214
    %v807 = vunpack.c.h.b16 %v214
    %v808 = vunpack.c.l.b16 %v215
    %v809 = vunpack.c.h.b16 %v215
    %v810 = vunpack.c.l.b16 %v216
    %v811 = vunpack.c.h.b16 %v216
    %v812 = vunpack.c.l.b16 %v217
    %v813 = vunpack.c.h.b16 %v217
    %v814 = vunpack.c.l.b16 %v218
    %v815 = vunpack.c.h.b16 %v218
    %v816 = vunpack.c.l.b16 %v219
    %v817 = vunpack.c.h.b16 %v219
    %v818 = vunpack.c.l.b16 %v220
    %v819 = vunpack.c.h.b16 %v220
    %v820 = vunpack.c.l.b16 %v221
    %v821 = vunpack.c.h.b16 %v221
    %v822 = vunpack.c.l.b16 %v222
    %v823 = vunpack.c.h.b16 %v222
    %v824 = vunpack.c.l.b16 %v223
    %v825 = vunpack.c.h.b16 %v223
    %v826 = vunpack.c.l.b16 %v224
    %v827 = vunpack.c.h.b16 %v224
    %v828 = vunpack.c.l.b16 %v225
    %v829 = vunpack.c.h.b16 %v225
    %v830 = vunpack.c.l.b16 %v226
    %v831 = vunpack.c.h.b16 %v226
    %v832 = vunpack.c.l.b16 %v227
    %v833 = vunpack.c.h.b16 %v227
    %v834 = vunpack.c.l.b16 %v228
    %v835 = vunpack.c.h.b16 %v228
    %v836 = vunpack.c.l.b16 %v229
    %v837 = vunpack.c.h.b16 %v229
    %v838 = vunpack.c.l.b16 %v230
    %v839 = vunpack.c.h.b16 %v230
    %v840 = vunpack.c.l.b16 %v231
    %v841 = vunpack.c.h.b16 %v231
    %v842 = vunpack.c.l.b16 %v232
    %v843 = vunpack.c.h.b16 %v232
    %v844 = vunpack.c.l.b16 %v233
    %v845 = vunpack.c.h.b16 %v233
    %v846 = vunpack.c.l.b16 %v234
    %v847 = vunpack.c.h.b16 %v234
    %v848 = vunpack.c.l.b16 %v235
    %v849 = vunpack.c.h.b16 %v235
    %v850 = vunpack.c.l.b16 %v236
    %v851 = vunpack.c.h.b16 %v236
    %v852 = vunpack.c.l.b16 %v237
    %v853 = vunpack.c.h.b16 %v237
    %v854 = vunpack.c.l.b16 %v238
    %v855 = vunpack.c.h.b16 %v238
    %v856 = vunpack.c.l.b16 %v239
    %v857 = vunpack.c.h.b16 %v239
    %v858 = vunpack.c.l.b16 %v240
    %v859 = vunpack.c.h.b16 %v240
    %v860 = vunpack.c.l.b16 %v241
    %v861 = vunpack.c.h.b16 %v241
    %v862 = vunpack.c.l.b16 %v242
    %v863 = vunpack.c.h.b16 %v242
    %v864 = vunpack.c.l.b16 %v243
    %v865 = vunpack.c.h.b16 %v243
    %v866 = vunpack.c.l.b16 %v244
    %v867 = vunpack.c.h.b16 %v244
    %v868 = vunpack.c.l.b16 %v245
    %v869 = vunpack.c.h.b16 %v245
    %v870 = vunpack.c.l.b16 %v246
    %v871 = vunpack.c.h.b16 %v246
    %v872 = vunpack.c.l.b16 %v247
    %v873 = vunpack.c.h.b16 %v247
    %v874 = vunpack.c.l.b16 %v248
    %v875 = vunpack.c.h.b16 %v248
    %v876 = vunpack.c.l.b16 %v249
    %v877 = vunpack.c.h.b16 %v249
    %v878 = vunpack.c.l.b16 %v250
    %v879 = vunpack.c.h.b16 %v250
    %v880 = vunpack.c.l.b16 %v251
    %v881 = vunpack.c.h.b16 %v251
    %v882 = vunpack.c.l.b16 %v252
    %v883 = vunpack.c.h.b16 %v252
    %v884 = vunpack.c.l.b16 %v253
    %v885 = vunpack.c.h.b16 %v253
    %v886 = vunpack.c.l.b16 %v254
    %v887 = vunpack.c.h.b16 %v254
    %v888 = vunpack.c.l.b16 %v255
    %v889 = vunpack.c.h.b16 %v255
    %v890 = vunpack.c.l.b16 %v256
    %v891 = vunpack.c.h.b16 %v256
    %v892 = vunpack.c.l.b16 %v257
    %v893 = vunpack.c.h.b16 %v257
    %v894 = vunpack.c.l.b16 %v258
    %v895 = vunpack.c.h.b16 %v258
    %v896 = vunpack.c.l.b16 %v259
    %v897 = vunpack.c.h.b16 %v259
    %v898 = vunpack.c.l.b16 %v260
    %v899 = vunpack.c.h.b16 %v260
    %v900 = vunpack.c.l.b16 %v261
    %v901 = vunpack.c.h.b16 %v261
    %v902 = vunpack.c.l.b16 %v262
    %v903 = vunpack.c.h.b16 %v262
    %v904 = vunpack.c.l.b16 %v263
    %v905 = vunpack.c.h.b16 %v263
    %v906 = vunpack.c.l.b16 %v264
    %v907 = vunpack.c.h.b16 %v264
    %v908 = vunpack.c.l.b16 %v265
    %v909 = vunpack.c.h.b16 %v265
    %v910 = vunpack.c.l.b16 %v266
    %v911 = vunpack.c.h.b16 %v266
    %v912 = vunpack.c.l.b16 %v267
    %v913 = vunpack.c.h.b16 %v267
    %v914 = vunpack.c.l.b16 %v268
    %v915 = vunpack.c.h.b16 %v268
    %v916 = vunpack.c.l.b16 %v269
    %v917 = vunpack.c.h.b16 %v269
    %v918 = vunpack.c.l.b16 %v270
    %v919 = vunpack.c.h.b16 %v270
    %v920 = vunpack.c.l.b16 %v271
    %v921 = vunpack.c.h.b16 %v271
    %v922 = vunpack.c.l.b16 %v272
    %v923 = vunpack.c.h.b16 %v272
    %v924 = vunpack.c.l.b16 %v273
    %v925 = vunpack.c.h.b16 %v273
    %v926 = vunpack.c.l.b16 %v274
    %v927 = vunpack.c.h.b16 %v274
    %v928 = vunpack.c.l.b16 %v275
    %v929 = vunpack.c.h.b16 %v275
    %v930 = vunpack.c.l.b16 %v276
    %v931 = vunpack.c.h.b16 %v276
    %v932 = vunpack.c.l.b16 %v277
    %v933 = vunpack.c.h.b16 %v277
    %v934 = vunpack.c.l.b16 %v278
    %v935 = vunpack.c.h.b16 %v278
    %v936 = vunpack.c.l.b16 %v279
    %v937 = vunpack.c.h.b16 %v279
    %v938 = vunpack.c.l.b16 %v280
    %v939 = vunpack.c.h.b16 %v280
    %v940 = vunpack.c.l.b16 %v281
    %v941 = vunpack.c.h.b16 %v281
    %v942 = vunpack.c.l.b16 %v282
    %v943 = vunpack.c.h.b16 %v282
    %v944 = vunpack.c.l.b16 %v283
    %v945 = vunpack.c.h.b16 %v283
    %v946 = vunpack.c.l.b16 %v284
    %v947 = vunpack.c.h.b16 %v284
    %v948 = vunpack.c.l.b16 %v285
    %v949 = vunpack.c.h.b16 %v285
    %v950 = vunpack.c.l.b16 %v286
    %v951 = vunpack.c.h.b16 %v286
    %v952 = vunpack.c.l.b16 %v287
    %v953 = vunpack.c.h.b16 %v287
    %v954 = vunpack.c.l.b16 %v288
    %v955 = vunpack.c.h.b16 %v288
    %v956 = vunpack.c.l.b16 %v289
    %v957 = vunpack.c.h.b16 %v289
    %v958 = vunpack.c.l.b16 %v290
    %v959 = vunpack.c.h.b16 %v290
    %v960 = vunpack.c.l.b16 %v291
    %v961 = vunpack.c.h.b16 %v291
    %v962 = vunpack.c.l.b16 %v292
    %v963 = vunpack.c.h.b16 %v292
    %v964 = vunpack.c.l.b16 %v293
    %v965 = vunpack.c.h.b16 %v293
    %v966 = vunpack.c.l.b16 %v294
    %v967 = vunpack.c.h.b16 %v294
    %v968 = vunpack.c.l.b16 %v295
    %v969 = vunpack.c.h.b16 %v295
    %v970 = vunpack.c.l.b16 %v296
    %v971 = vunpack.c.h.b16 %v296
    %v972 = vunpack.c.l.b16 %v297
    %v973 = vunpack.c.h.b16 %v297
    %v974 = vunpack.c.l.b16 %v298
    %v975 = vunpack.c.h.b16 %v298
    %v976 = vunpack.c.l.b16 %v299
    %v977 = vunpack.c.h.b16 %v299
    %v978 = vunpack.c.l.b16 %v300
    %v979 = vunpack.c.h.b16 %v300
    %v980 = vunpack.c.l.b16 %v301
    %v981 = vunpack.c.h.b16 %v301
    %v982 = vunpack.c.l.b16 %v302
    %v983 = vunpack.c.h.b16 %v302
    %v984 = vunpack.c.l.b16 %v303
    %v985 = vunpack.c.h.b16 %v303
    %v986 = vunpack.c.l.b16 %v304
    %v987 = vunpack.c.h.b16 %v304
    %v988 = vunpack.c.l.b16 %v305
    %v989 = vunpack.c.h.b16 %v305
    %v990 = vunpack.c.l.b16 %v306
    %v991 = vunpack.c.h.b16 %v306
    %v992 = vunpack.c.l.b16 %v307
    %v993 = vunpack.c.h.b16 %v307
    %v994 = vunpack.c.l.b16 %v308
    %v995 = vunpack.c.h.b16 %v308
    %v996 = vunpack.c.l.b16 %v309
    %v997 = vunpack.c.h.b16 %v309
    %v998 = vunpack.c.l.b16 %v310
    %v999 = vunpack.c.h.b16 %v310
    %v1000 = vunpack.c.l.b16 %v311
    %v1001 = vunpack.c.h.b16 %v311
    %v1002 = vunpack.c.l.b16 %v312
    %v1003 = vunpack.c.h.b16 %v312
    %v1004 = vunpack.c.l.b16 %v313
    %v1005 = vunpack.c.h.b16 %v313
    %v1006 = vunpack.c.l.b16 %v314
    %v1007 = vunpack.c.h.b16 %v314
    %v1008 = vunpack.c.l.b16 %v315
    %v1009 = vunpack.c.h.b16 %v315
    %v1010 = vunpack.c.l.b16 %v316
    %v1011 = vunpack.c.h.b16 %v316
    %v1012 = vunpack.c.l.b16 %v317
    %v1013 = vunpack.c.h.b16 %v317
    %v1014 = vunpack.c.l.b16 %v318
    %v1015 = vunpack.c.h.b16 %v318
    %v1016 = vunpack.c.l.b16 %v319
    %v1017 = vunpack.c.h.b16 %v319
    %v1018 = vunpack.c.l.b16 %v320
    %v1019 = vunpack.c.h.b16 %v320
    %v1020 = vunpack.c.l.b16 %v321
    %v1021 = vunpack.c.h.b16 %v321
    %v1022 = vunpack.c.l.b16 %v322
    %v1023 = vunpack.c.h.b16 %v322
    %v1024 = vunpack.c.l.b16 %v323
    %v1025 = vunpack.c.h.b16 %v323
    %v1026 = vunpack.c.l.b16 %v324
    %v1027 = vunpack.c.h.b16 %v324
    %v1028 = vunpack.c.l.b16 %v325
    %v1029 = vunpack.c.h.b16 %v325
    %v1030 = vunpack.c.l.b16 %v326
    %v1031 = vunpack.c.h.b16 %v326
    %v1032 = vunpack.c.l.b16 %v327
    %v1033 = vunpack.c.h.b16 %v327
    %v1034 = vunpack.c.l.b16 %v328
    %v1035 = vunpack.c.h.b16 %v328
    %v1036 = vunpack.c.l.b16 %v329
    %v1037 = vunpack.c.h.b16 %v329
    %v1038 = vunpack.c.l.b16 %v330
    %v1039 = vunpack.c.h.b16 %v330
    %v1040 = vunpack.c.l.b16 %v331
    %v1041 = vunpack.c.h.b16 %v331
    %v1042 = vunpack.c.l.b16 %v332
    %v1043 = vunpack.c.h.b16 %v332
    %v1044 = vunpack.c.l.b16 %v333
    %v1045 = vunpack.c.h.b16 %v333
    %v1046 = vunpack.c.l.b16 %v334
    %v1047 = vunpack.c.h.b16 %v334
    %v1048 = vunpack.c.l.b16 %v335
    %v1049 = vunpack.c.h.b16 %v335
    %v1050 = vunpack.c.l.b16 %v336
    %v1051 = vunpack.c.h.b16 %v336
    %v1052 = vunpack.c.l.b16 %v337
    %v1053 = vunpack.c.h.b16 %v337
    %v1054 = vunpack.c.l.b16 %v338
    %v1055 = vunpack.c.h.b16 %v338
    %v1056 = vunpack.c.l.b16 %v339
    %v1057 = vunpack.c.h.b16 %v339
    %v1058 = vunpack.c.l.b16 %v340
    %v1059 = vunpack.c.h.b16 %v340
    %v1060 = vunpack.c.l.b16 %v341
    %v1061 = vunpack.c.h.b16 %v341
    %v1062 = vunpack.c.l.b16 %v342
    %v1063 = vunpack.c.h.b16 %v342
    %v1064 = vunpack.c.l.b16 %v343
    %v1065 = vunpack.c.h.b16 %v343
    %v1066 = vunpack.c.l.b16 %v344
    %v1067 = vunpack.c.h.b16 %v344
    %v1068 = vunpack.c.l.b16 %v345
    %v1069 = vunpack.c.h.b16 %v345
    %v1070 = vunpack.c.l.b16 %v346
    %v1071 = vunpack.c.h.b16 %v346
    %v1072 = vunpack.c.l.b16 %v347
    %v1073 = vunpack.c.h.b16 %v347
    %v1074 = vunpack.c.l.b16 %v348
    %v1075 = vunpack.c.h.b16 %v348
    %v1076 = vunpack.c.l.b16 %v349
    %v1077 = vunpack.c.h.b16 %v349
    %v1078 = vunpack.c.l.b16 %v350
    %v1079 = vunpack.c.h.b16 %v350
    %v1080 = vunpack.c.l.b16 %v351
    %v1081 = vunpack.c.h.b16 %v351
    %v1082 = vunpack.c.l.b16 %v352
    %v1083 = vunpack.c.h.b16 %v352
    %v1084 = vunpack.c.l.b16 %v353
    %v1085 = vunpack.c.h.b16 %v353
    %v1086 = vunpack.c.l.b16 %v354
    %v1087 = vunpack.c.h.b16 %v354
    %v1088 = vunpack.c.l.b16 %v355
    %v1089 = vunpack.c.h.b16 %v355
    %v1090 = vunpack.c.l.b16 %v356
    %v1091 = vunpack.c.h.b16 %v356
    %v1092 = vunpack.c.l.b16 %v357
    %v1093 = vunpack.c.h.b16 %v357
    %v1094 = vunpack.c.l.b16 %v358
    %v1095 = vunpack.c.h.b16 %v358
    %v1096 = vunpack.c.l.b16 %v359
    %v1097 = vunpack.c.h.b16 %v359
    %v1098 = vunpack.c.l.b16 %v360
    %v1099 = vunpack.c.h.b16 %v360
    %v1100 = vunpack.c.l.b16 %v361
    %v1101 = vunpack.c.h.b16 %v361
    %v1102 = vunpack.c.l.b16 %v362
    %v1103 = vunpack.c.h.b16 %v362
    %v1104 = vunpack.c.l.b16 %v363
    %v1105 = vunpack.c.h.b16 %v363
    %v1106 = vunpack.c.l.b16 %v364
    %v1107 = vunpack.c.h.b16 %v364
    %v1108 = vunpack.c.l.b16 %v365
    %v1109 = vunpack.c.h.b16 %v365
    %v1110 = vunpack.c.l.b16 %v366
    %v1111 = vunpack.c.h.b16 %v366
    %v1112 = vunpack.c.l.b16 %v367
    %v1113 = vunpack.c.h.b16 %v367
    %v1114 = vunpack.c.l.b16 %v368
    %v1115 = vunpack.c.h.b16 %v368
    %v1116 = vunpack.c.l.b16 %v369
    %v1117 = vunpack.c.h.b16 %v369
    %v1118 = vunpack.c.l.b16 %v370
    %v1119 = vunpack.c.h.b16 %v370
    %v1120 = vunpack.c.l.b16 %v371
    %v1121 = vunpack.c.h.b16 %v371
    %v1122 = vunpack.c.l.b16 %v372
    %v1123 = vunpack.c.h.b16 %v372
    %v1124 = vunpack.c.l.b16 %v373
    %v1125 = vunpack.c.h.b16 %v373
    %v1126 = vunpack.c.l.b16 %v374
    %v1127 = vunpack.c.h.b16 %v374
    %v1128 = vunpack.c.l.b16 %v375
    %v1129 = vunpack.c.h.b16 %v375
    %v1130 = vunpack.c.l.b16 %v376
    %v1131 = vunpack.c.h.b16 %v376
    %v1132 = vunpack.c.l.b16 %v377
    %v1133 = vunpack.c.h.b16 %v377
    %v1134 = vunpack.c.l.b16 %v378
    %v1135 = vunpack.c.h.b16 %v378
    %v1136 = vunpack.c.l.b16 %v379
    %v1137 = vunpack.c.h.b16 %v379
    %v1138 = vunpack.c.l.b16 %v380
    %v1139 = vunpack.c.h.b16 %v380
    %v1140 = vunpack.c.l.b16 %v381
    %v1141 = vunpack.c.h.b16 %v381
    %v1142 = vunpack.c.l.b16 %v382
    %v1143 = vunpack.c.h.b16 %v382
    %v1144 = vunpack.c.l.b16 %v383
    %v1145 = vunpack.c.h.b16 %v383
    %v1146 = vunpack.c.l.b16 %v384
    %v1147 = vunpack.c.h.b16 %v384
    %v1148 = vunpack.c.l.b16 %v385
    %v1149 = vunpack.c.h.b16 %v385
    %v1150 = vunpack.c.l.b16 %v386
    %v1151 = vunpack.c.h.b16 %v386
    %v1152 = vunpack.c.l.b16 %v387
    %v1153 = vunpack.c.h.b16 %v387
    %v1154 = vunpack.c.l.b16 %v388
    %v1155 = vunpack.c.h.b16 %v388
    %v1156 = vunpack.c.l.b16 %v389
    %v1157 = vunpack.c.h.b16 %v389
    %v1158 = vpack.c.b16 %v650, %v646
    %v1159 = vpack.c.b16 %v651, %v647
    %v1160 = vpack.c.b16 %v652, %v648
    %v1161 = vpack.c.b16 %v653, %v649
    %v1162 = vpack.c.b16 %v658, %v654
    %v1163 = vpack.c.b16 %v659, %v655
    %v1164 = vpack.c.b16 %v660, %v656
    %v1165 = vpack.c.b16 %v661, %v657
    %v1166 = vpack.c.b16 %v666, %v662
    %v1167 = vpack.c.b16 %v667, %v663
    %v1168 = vpack.c.b16 %v668, %v664
    %v1169 = vpack.c.b16 %v669, %v665
    %v1170 = vpack.c.b16 %v674, %v670
    %v1171 = vpack.c.b16 %v675, %v671
    %v1172 = vpack.c.b16 %v676, %v672
    %v1173 = vpack.c.b16 %v677, %v673
    %v1174 = vpack.c.b16 %v682, %v678
    %v1175 = vpack.c.b16 %v683, %v679
    %v1176 = vpack.c.b16 %v684, %v680
    %v1177 = vpack.c.b16 %v685, %v681
    %v1178 = vpack.c.b16 %v690, %v686
    %v1179 = vpack.c.b16 %v691, %v687
    %v1180 = vpack.c.b16 %v692, %v688
    %v1181 = vpack.c.b16 %v693, %v689
    %v1182 = vpack.c.b16 %v698, %v694
    %v1183 = vpack.c.b16 %v699, %v695
    %v1184 = vpack.c.b16 %v700, %v696
    %v1185 = vpack.c.b16 %v701, %v697
    %v1186 = vpack.c.b16 %v706, %v702
    %v1187 = vpack.c.b16 %v707, %v703
    %v1188 = vpack.c.b16 %v708, %v704
    %v1189 = vpack.c.b16 %v709, %v705
    %v1190 = vpack.c.b16 %v714, %v710
    %v1191 = vpack.c.b16 %v715, %v711
    %v1192 = vpack.c.b16 %v716, %v712
    %v1193 = vpack.c.b16 %v717, %v713
    %v1194 = vpack.c.b16 %v722, %v718
    %v1195 = vpack.c.b16 %v723, %v719
    %v1196 = vpack.c.b16 %v724, %v720
    %v1197 = vpack.c.b16 %v725, %v721
    %v1198 = vpack.c.b16 %v730, %v726
    %v1199 = vpack.c.b16 %v731, %v727
    %v1200 = vpack.c.b16 %v732, %v728
    %v1201 = vpack.c.b16 %v733, %v729
    %v1202 = vpack.c.b16 %v738, %v734
    %v1203 = vpack.c.b16 %v739, %v735
    %v1204 = vpack.c.b16 %v740, %v736
    %v1205 = vpack.c.b16 %v741, %v737
    %v1206 = vpack.c.b16 %v746, %v742
    %v1207 = vpack.c.b16 %v747, %v743
    %v1208 = vpack.c.b16 %v748, %v744
    %v1209 = vpack.c.b16 %v749, %v745
    %v1210 = vpack.c.b16 %v754, %v750
    %v1211 = vpack.c.b16 %v755, %v751
    %v1212 = vpack.c.b16 %v756, %v752
    %v1213 = vpack.c.b16 %v757, %v753
    %v1214 = vpack.c.b16 %v762, %v758
    %v1215 = vpack.c.b16 %v763, %v759
    %v1216 = vpack.c.b16 %v764, %v760
    %v1217 = vpack.c.b16 %v765, %v761
    %v1218 = vpack.c.b16 %v770, %v766
    %v1219 = vpack.c.b16 %v771, %v767
    %v1220 = vpack.c.b16 %v772, %v768
    %v1221 = vpack.c.b16 %v773, %v769
    %v1222 = vpack.c.b16 %v778, %v774
    %v1223 = vpack.c.b16 %v779, %v775
    %v1224 = vpack.c.b16 %v780, %v776
    %v1225 = vpack.c.b16 %v781, %v777
    %v1226 = vpack.c.b16 %v786, %v782
    %v1227 = vpack.c.b16 %v787, %v783
    %v1228 = vpack.c.b16 %v788, %v784
    %v1229 = vpack.c.b16 %v789, %v785
    %v1230 = vpack.c.b16 %v794, %v790
    %v1231 = vpack.c.b16 %v795, %v791
    %v1232 = vpack.c.b16 %v796, %v792
    %v1233 = vpack.c.b16 %v797, %v793
    %v1234 = vpack.c.b16 %v802, %v798
    %v1235 = vpack.c.b16 %v803, %v799
    %v1236 = vpack.c.b16 %v804, %v800
    %v1237 = vpack.c.b16 %v805, %v801
    %v1238 = vpack.c.b16 %v810, %v806
    %v1239 = vpack.c.b16 %v811, %v807
    %v1240 = vpack.c.b16 %v812, %v808
    %v1241 = vpack.c.b16 %v813, %v809
    %v1242 = vpack.c.b16 %v818, %v814
    %v1243 = vpack.c.b16 %v819, %v815
    %v1244 = vpack.c.b16 %v820, %v816
    %v1245 = vpack.c.b16 %v821, %v817
    %v1246 = vpack.c.b16 %v826, %v822
    %v1247 = vpack.c.b16 %v827, %v823
    %v1248 = vpack.c.b16 %v828, %v824
    %v1249 = vpack.c.b16 %v829, %v825
    %v1250 = vpack.c.b16 %v834, %v830
    %v1251 = vpack.c.b16 %v835, %v831
    %v1252 = vpack.c.b16 %v836, %v832
    %v1253 = vpack.c.b16 %v837, %v833
    %v1254 = vpack.c.b16 %v842, %v838
    %v1255 = vpack.c.b16 %v843, %v839
    %v1256 = vpack.c.b16 %v844, %v840
    %v1257 = vpack.c.b16 %v845, %v841
    %v1258 = vpack.c.b16 %v850, %v846
    %v1259 = vpack.c.b16 %v851, %v847
    %v1260 = vpack.c.b16 %v852, %v848
    %v1261 = vpack.c.b16 %v853, %v849
    %v1262 = vpack.c.b16 %v858, %v854
    %v1263 = vpack.c.b16 %v859, %v855
    %v1264 = vpack.c.b16 %v860, %v856
    %v1265 = vpack.c.b16 %v861, %v857
    %v1266 = vpack.c.b16 %v866, %v862
    %v1267 = vpack.c.b16 %v867, %v863
    %v1268 = vpack.c.b16 %v868, %v864
    %v1269 = vpack.c.b16 %v869, %v865
    %v1270 = vpack.c.b16 %v874, %v870
    %v1271 = vpack.c.b16 %v875, %v871
    %v1272 = vpack.c.b16 %v876, %v872
    %v1273 = vpack.c.b16 %v877, %v873
    %v1274 = vpack.c.b16 %v882, %v878
    %v1275 = vpack.c.b16 %v883, %v879
    %v1276 = vpack.c.b16 %v884, %v880
    %v1277 = vpack.c.b16 %v885, %v881
    %v1278 = vpack.c.b16 %v890, %v886
    %v1279 = vpack.c.b16 %v891, %v887
    %v1280 = vpack.c.b16 %v892, %v888
    %v1281 = vpack.c.b16 %v893, %v889
    %v1282 = vpack.c.b16 %v898, %v894
    %v1283 = vpack.c.b16 %v899, %v895
    %v1284 = vpack.c.b16 %v900, %v896
    %v1285 = vpack.c.b16 %v901, %v897
    %v1286 = vpack.c.b16 %v906, %v902
    %v1287 = vpack.c.b16 %v907, %v903
    %v1288 = vpack.c.b16 %v908, %v904
    %v1289 = vpack.c.b16 %v909, %v905
    %v1290 = vpack.c.b16 %v914, %v910
    %v1291 = vpack.c.b16 %v915, %v911
    %v1292 = vpack.c.b16 %v916, %v912
    %v1293 = vpack.c.b16 %v917, %v913
    %v1294 = vpack.c.b16 %v922, %v918
    %v1295 = vpack.c.b16 %v923, %v919
    %v1296 = vpack.c.b16 %v924, %v920
    %v1297 = vpack.c.b16 %v925, %v921
    %v1298 = vpack.c.b16 %v930, %v926
    %v1299 = vpack.c.b16 %v931, %v927
    %v1300 = vpack.c.b16 %v932, %v928
    %v1301 = vpack.c.b16 %v933, %v929
    %v1302 = vpack.c.b16 %v938, %v934
    %v1303 = vpack.c.b16 %v939, %v935
    %v1304 = vpack.c.b16 %v940, %v936
    %v1305 = vpack.c.b16 %v941, %v937
    %v1306 = vpack.c.b16 %v946, %v942
    %v1307 = vpack.c.b16 %v947, %v943
    %v1308 = vpack.c.b16 %v948, %v944
    %v1309 = vpack.c.b16 %v949, %v945
    %v1310 = vpack.c.b16 %v954, %v950
    %v1311 = vpack.c.b16 %v955, %v951
    %v1312 = vpack.c.b16 %v956, %v952
    %v1313 = vpack.c.b16 %v957, %v953
    %v1314 = vpack.c.b16 %v962, %v958
    %v1315 = vpack.c.b16 %v963, %v959
    %v1316 = vpack.c.b16 %v964, %v960
    %v1317 = vpack.c.b16 %v965, %v961
    %v1318 = vpack.c.b16 %v970, %v966
    %v1319 = vpack.c.b16 %v971, %v967
    %v1320 = vpack.c.b16 %v972, %v968
    %v1321 = vpack.c.b16 %v973, %v969
    %v1322 = vpack.c.b16 %v978, %v974
    %v1323 = vpack.c.b16 %v979, %v975
    %v1324 = vpack.c.b16 %v980, %v976
    %v1325 = vpack.c.b16 %v981, %v977
    %v1326 = vpack.c.b16 %v986, %v982
    %v1327 = vpack.c.b16 %v987, %v983
    %v1328 = vpack.c.b16 %v988, %v984
    %v1329 = vpack.c.b16 %v989, %v985
    %v1330 = vpack.c.b16 %v994, %v990
    %v1331 = vpack.c.b16 %v995, %v991
    %v1332 = vpack.c.b16 %v996, %v992
    %v1333 = vpack.c.b16 %v997, %v993
    %v1334 = vpack.c.b16 %v1002, %v998
    %v1335 = vpack.c.b16 %v1003, %v999
    %v1336 = vpack.c.b16 %v1004, %v1000
    %v1337 = vpack.c.b16 %v1005, %v1001
    %v1338 = vpack.c.b16 %v1010, %v1006
    %v1339 = vpack.c.b16 %v1011, %v1007
    %v1340 = vpack.c.b16 %v1012, %v1008
    %v1341 = vpack.c.b16 %v1013, %v1009
    %v1342 = vpack.c.b16 %v1018, %v1014
    %v1343 = vpack.c.b16 %v1019, %v1015
    %v1344 = vpack.c.b16 %v1020, %v1016
    %v1345 = vpack.c.b16 %v1021, %v1017
    %v1346 = vpack.c.b16 %v1026, %v1022
    %v1347 = vpack.c.b16 %v1027, %v1023
    %v1348 = vpack.c.b16 %v1028, %v1024
    %v1349 = vpack.c.b16 %v1029, %v1025
    %v1350 = vpack.c.b16 %v1034, %v1030
    %v1351 = vpack.c.b16 %v1035, %v1031
    %v1352 = vpack.c.b16 %v1036, %v1032
    %v1353 = vpack.c.b16 %v1037, %v1033
    %v1354 = vpack.c.b16 %v1042, %v1038
    %v1355 = vpack.c.b16 %v1043, %v1039
    %v1356 = vpack.c.b16 %v1044, %v1040
    %v1357 = vpack.c.b16 %v1045, %v1041
    %v1358 = vpack.c.b16 %v1050, %v1046
    %v1359 = vpack.c.b16 %v1051, %v1047
    %v1360 = vpack.c.b16 %v1052, %v1048
    %v1361 = vpack.c.b16 %v1053, %v1049
    %v1362 = vpack.c.b16 %v1058, %v1054
    %v1363 = vpack.c.b16 %v1059, %v1055
    %v1364 = vpack.c.b16 %v1060, %v1056
    %v1365 = vpack.c.b16 %v1061, %v1057
    %v1366 = vpack.c.b16 %v1066, %v1062
    %v1367 = vpack.c.b16 %v1067, %v1063
    %v1368 = vpack.c.b16 %v1068, %v1064
    %v1369 = vpack.c.b16 %v1069, %v1065
    %v1370 = vpack.c.b16 %v1074, %v1070
    %v1371 = vpack.c.b16 %v1075, %v1071
    %v1372 = vpack.c.b16 %v1076, %v1072
    %v1373 = vpack.c.b16 %v1077, %v1073
    %v1374 = vpack.c.b16 %v1082, %v1078
    %v1375 = vpack.c.b16 %v1083, %v1079
    %v1376 = vpack.c.b16 %v1084, %v1080
    %v1377 = vpack.c.b16 %v1085, %v1081
    %v1378 = vpack.c.b16 %v1090, %v1086
    %v1379 = vpack.c.b16 %v1091, %v1087
    %v1380 = vpack.c.b16 %v1092, %v1088
    %v1381 = vpack.c.b16 %v1093, %v1089
    %v1382 = vpack.c.b16 %v1098, %v1094
    %v1383 = vpack.c.b16 %v1099, %v1095
    %v1384 = vpack.c.b16 %v1100, %v1096
    %v1385 = vpack.c.b16 %v1101, %v1097
    %v1386 = vpack.c.b16 %v1106, %v1102
    %v1387 = vpack.c.b16 %v1107, %v1103
    %v1388 = vpack.c.b16 %v1108, %v1104
    %v1389 = vpack.c.b16 %v1109, %v1105
    %v1390 = vpack.c.b16 %v1114, %v1110
    %v1391 = vpack.c.b16 %v1115, %v1111
    %v1392 = vpack.c.b16 %v1116, %v1112
    %v1393 = vpack.c.b16 %v1117, %v1113
    %v1394 = vpack.c.b16 %v1122, %v1118
    %v1395 = vpack.c.b16 %v1123, %v1119
    %v1396 = vpack.c.b16 %v1124, %v1120
    %v1397 = vpack.c.b16 %v1125, %v1121
    %v1398 = vpack.c.b16 %v1130, %v1126
    %v1399 = vpack.c.b16 %v1131, %v1127
    %v1400 = vpack.c.b16 %v1132, %v1128
    %v1401 = vpack.c.b16 %v1133, %v1129
    %v1402 = vpack.c.b16 %v1138, %v1134
    %v1403 = vpack.c.b16 %v1139, %v1135
    %v1404 = vpack.c.b16 %v1140, %v1136
    %v1405 = vpack.c.b16 %v1141, %v1137
    %v1406 = vpack.c.b16 %v1146, %v1142
    %v1407 = vpack.c.b16 %v1147, %v1143
    %v1408 = vpack.c.b16 %v1148, %v1144
    %v1409 = vpack.c.b16 %v1149, %v1145
    %v1410 = vpack.c.b16 %v1154, %v1150
    %v1411 = vpack.c.b16 %v1155, %v1151
    %v1412 = vpack.c.b16 %v1156, %v1152
    %v1413 = vpack.c.b16 %v1157, %v1153
    %1670 = vmatprep.subr.bf16.mxu0 %v1187
    %1671 = vmatpush1.bf16.msra.mxu0 %v1186
    %1672 = vmatprep.subr.bf16.mxu0 %v1183
    %1673 = vmatpush1.bf16.msra.mxu0 %v1182
    %1674 = vmatprep.subr.bf16.mxu0 %v1179
    %1675 = vmatpush1.bf16.msra.mxu0 %v1178
    %1676 = vmatprep.subr.bf16.mxu0 %v1175
    %1677 = vmatpush1.bf16.msra.mxu0 %v1174
    %1678 = vmatprep.subr.bf16.mxu0 %v1171
    %1679 = vmatpush1.bf16.msra.mxu0 %v1170
    %1680 = vmatprep.subr.bf16.mxu0 %v1167
    %1681 = vmatpush1.bf16.msra.mxu0 %v1166
    %1682 = vmatprep.subr.bf16.mxu0 %v1163
    %1683 = vmatpush1.bf16.msra.mxu0 %v1162
    %1684 = vmatprep.subr.bf16.mxu0 %v1159
    %1685 = vmatpush1.bf16.msra.mxu0 %v1158
    %1686 = vmatprep.subr.bf16.mxu0 %v1219
    %1687 = vmatpush2.bf16.msra.mxu0 %v1218
    %1688 = vmatprep.subr.bf16.mxu0 %v1215
    %1689 = vmatpush2.bf16.msra.mxu0 %v1214
    %1690 = vmatprep.subr.bf16.mxu0 %v1211
    %1691 = vmatpush2.bf16.msra.mxu0 %v1210
    %1692 = vmatprep.subr.bf16.mxu0 %v1207
    %1693 = vmatpush2.bf16.msra.mxu0 %v1206
    %1694 = vmatprep.subr.bf16.mxu0 %v1203
    %1695 = vmatpush2.bf16.msra.mxu0 %v1202
    %1696 = vmatprep.subr.bf16.mxu0 %v1199
    %1697 = vmatpush2.bf16.msra.mxu0 %v1198
    %1698 = vmatprep.subr.bf16.mxu0 %v1195
    %1699 = vmatpush2.bf16.msra.mxu0 %v1194
    %1700 = vmatprep.subr.bf16.mxu0 %v1191
    %1701 = vmatpush2.bf16.msra.mxu0 %v1190
    %1702 = vmatprep.mubr.bf16.mxu0 %v127
    %1703 = vmatmul.mubr.bf16.gmra.mxu0 %v126
    %v1704 = vpop.f32.mrf.mxu0
    %v1705 = vadd.f32 0.0, %v1704
    %v1706 = vpop.f32.mrf.mxu0
    %v1707 = vadd.f32 0.0, %v1706
    %v1708 = vpop.f32.mrf.mxu0
    %v1709 = vpop.f32.mrf.mxu0
    %1710 = vdwg.mxu0
    %1711 = vmatprep.subr.bf16.mxu0 %v1251
    %1712 = vmatpush1.bf16.msra.mxu0 %v1250
    %1713 = vmatprep.subr.bf16.mxu0 %v1247
    %1714 = vmatpush1.bf16.msra.mxu0 %v1246
    %1715 = vmatprep.subr.bf16.mxu0 %v1243
    %1716 = vmatpush1.bf16.msra.mxu0 %v1242
    %1717 = vmatprep.subr.bf16.mxu0 %v1239
    %1718 = vmatpush1.bf16.msra.mxu0 %v1238
    %1719 = vmatprep.subr.bf16.mxu0 %v1235
    %1720 = vmatpush1.bf16.msra.mxu0 %v1234
    %1721 = vmatprep.subr.bf16.mxu0 %v1231
    %1722 = vmatpush1.bf16.msra.mxu0 %v1230
    %1723 = vmatprep.subr.bf16.mxu0 %v1227
    %1724 = vmatpush1.bf16.msra.mxu0 %v1226
    %1725 = vmatprep.subr.bf16.mxu0 %v1223
    %1726 = vmatpush1.bf16.msra.mxu0 %v1222
    %1727 = vmatprep.subr.bf16.mxu0 %v1283
    %1728 = vmatpush2.bf16.msra.mxu0 %v1282
    %1729 = vmatprep.subr.bf16.mxu0 %v1279
    %1730 = vmatpush2.bf16.msra.mxu0 %v1278
    %1731 = vmatprep.subr.bf16.mxu0 %v1275
    %1732 = vmatpush2.bf16.msra.mxu0 %v1274
    %1733 = vmatprep.subr.bf16.mxu0 %v1271
    %1734 = vmatpush2.bf16.msra.mxu0 %v1270
    %1735 = vmatprep.subr.bf16.mxu0 %v1267
    %1736 = vmatpush2.bf16.msra.mxu0 %v1266
    %1737 = vmatprep.subr.bf16.mxu0 %v1263
    %1738 = vmatpush2.bf16.msra.mxu0 %v1262
    %1739 = vmatprep.subr.bf16.mxu0 %v1259
    %1740 = vmatpush2.bf16.msra.mxu0 %v1258
    %1741 = vmatprep.subr.bf16.mxu0 %v1255
    %1742 = vmatpush2.bf16.msra.mxu0 %v1254
    %1743 = vmatprep.mubr.bf16.mxu0 %v129
    %1744 = vmatmul.mubr.bf16.gmra.mxu0 %v128
    %v1745 = vpop.f32.mrf.mxu0
    %v1746 = vadd.f32 %v1705, %v1745
    %v1747 = vpop.f32.mrf.mxu0
    %v1748 = vadd.f32 %v1707, %v1747
    %v1749 = vpop.f32.mrf.mxu0
    %v1750 = vpop.f32.mrf.mxu0
    %1751 = vdwg.mxu0
    %1752 = vmatprep.subr.bf16.mxu0 %v1315
    %1753 = vmatpush1.bf16.msra.mxu0 %v1314
    %1754 = vmatprep.subr.bf16.mxu0 %v1311
    %1755 = vmatpush1.bf16.msra.mxu0 %v1310
    %1756 = vmatprep.subr.bf16.mxu0 %v1307
    %1757 = vmatpush1.bf16.msra.mxu0 %v1306
    %1758 = vmatprep.subr.bf16.mxu0 %v1303
    %1759 = vmatpush1.bf16.msra.mxu0 %v1302
    %1760 = vmatprep.subr.bf16.mxu0 %v1299
    %1761 = vmatpush1.bf16.msra.mxu0 %v1298
    %1762 = vmatprep.subr.bf16.mxu0 %v1295
    %1763 = vmatpush1.bf16.msra.mxu0 %v1294
    %1764 = vmatprep.subr.bf16.mxu0 %v1291
    %1765 = vmatpush1.bf16.msra.mxu0 %v1290
    %1766 = vmatprep.subr.bf16.mxu0 %v1287
    %1767 = vmatpush1.bf16.msra.mxu0 %v1286
    %1768 = vmatprep.subr.bf16.mxu0 %v1347
    %1769 = vmatpush2.bf16.msra.mxu0 %v1346
    %1770 = vmatprep.subr.bf16.mxu0 %v1343
    %1771 = vmatpush2.bf16.msra.mxu0 %v1342
    %1772 = vmatprep.subr.bf16.mxu0 %v1339
    %1773 = vmatpush2.bf16.msra.mxu0 %v1338
    %1774 = vmatprep.subr.bf16.mxu0 %v1335
    %1775 = vmatpush2.bf16.msra.mxu0 %v1334
    %1776 = vmatprep.subr.bf16.mxu0 %v1331
    %1777 = vmatpush2.bf16.msra.mxu0 %v1330
    %1778 = vmatprep.subr.bf16.mxu0 %v1327
    %1779 = vmatpush2.bf16.msra.mxu0 %v1326
    %1780 = vmatprep.subr.bf16.mxu0 %v1323
    %1781 = vmatpush2.bf16.msra.mxu0 %v1322
    %1782 = vmatprep.subr.bf16.mxu0 %v1319
    %1783 = vmatpush2.bf16.msra.mxu0 %v1318
    %1784 = vmatprep.mubr.bf16.mxu0 %v131
    %1785 = vmatmul.mubr.bf16.gmra.mxu0 %v130
    %v1786 = vpop.f32.mrf.mxu0
    %v1787 = vadd.f32 %v1746, %v1786
    %v1788 = vpop.f32.mrf.mxu0
    %v1789 = vadd.f32 %v1748, %v1788
    %v1790 = vpop.f32.mrf.mxu0
    %v1791 = vpop.f32.mrf.mxu0
    %1792 = vdwg.mxu0
    %1793 = vmatprep.subr.bf16.mxu0 %v1379
    %1794 = vmatpush1.bf16.msra.mxu0 %v1378
    %1795 = vmatprep.subr.bf16.mxu0 %v1375
    %1796 = vmatpush1.bf16.msra.mxu0 %v1374
    %1797 = vmatprep.subr.bf16.mxu0 %v1371
    %1798 = vmatpush1.bf16.msra.mxu0 %v1370
    %1799 = vmatprep.subr.bf16.mxu0 %v1367
    %1800 = vmatpush1.bf16.msra.mxu0 %v1366
    %1801 = vmatprep.subr.bf16.mxu0 %v1363
    %1802 = vmatpush1.bf16.msra.mxu0 %v1362
    %1803 = vmatprep.subr.bf16.mxu0 %v1359
    %1804 = vmatpush1.bf16.msra.mxu0 %v1358
    %1805 = vmatprep.subr.bf16.mxu0 %v1355
    %1806 = vmatpush1.bf16.msra.mxu0 %v1354
    %1807 = vmatprep.subr.bf16.mxu0 %v1351
    %1808 = vmatpush1.bf16.msra.mxu0 %v1350
    %1809 = vmatprep.subr.bf16.mxu0 %v1411
    %1810 = vmatpush2.bf16.msra.mxu0 %v1410
    %1811 = vmatprep.subr.bf16.mxu0 %v1407
    %1812 = vmatpush2.bf16.msra.mxu0 %v1406
    %1813 = vmatprep.subr.bf16.mxu0 %v1403
    %1814 = vmatpush2.bf16.msra.mxu0 %v1402
    %1815 = vmatprep.subr.bf16.mxu0 %v1399
    %1816 = vmatpush2.bf16.msra.mxu0 %v1398
    %1817 = vmatprep.subr.bf16.mxu0 %v1395
    %1818 = vmatpush2.bf16.msra.mxu0 %v1394
    %1819 = vmatprep.subr.bf16.mxu0 %v1391
    %1820 = vmatpush2.bf16.msra.mxu0 %v1390
    %1821 = vmatprep.subr.bf16.mxu0 %v1387
    %1822 = vmatpush2.bf16.msra.mxu0 %v1386
    %1823 = vmatprep.subr.bf16.mxu0 %v1383
    %1824 = vmatpush2.bf16.msra.mxu0 %v1382
    %1825 = vmatprep.mubr.bf16.mxu0 %v133
    %1826 = vmatmul.mubr.bf16.gmra.mxu0 %v132
    %v1827 = vpop.f32.mrf.mxu0
    %v1828 = vadd.f32 %v1787, %v1827
    %v1829 = vpop.f32.mrf.mxu0
    %v1830 = vadd.f32 %v1789, %v1829
    %v1831 = vpop.f32.mrf.mxu0
    %v1832 = vpop.f32.mrf.mxu0
    %1833 = vdwg.mxu0
    %1834 = vmatprep.subr.bf16.mxu0 %v1189
    %1835 = vmatpush1.bf16.msra.mxu0 %v1188
    %1836 = vmatprep.subr.bf16.mxu0 %v1185
    %1837 = vmatpush1.bf16.msra.mxu0 %v1184
    %1838 = vmatprep.subr.bf16.mxu0 %v1181
    %1839 = vmatpush1.bf16.msra.mxu0 %v1180
    %1840 = vmatprep.subr.bf16.mxu0 %v1177
    %1841 = vmatpush1.bf16.msra.mxu0 %v1176
    %1842 = vmatprep.subr.bf16.mxu0 %v1173
    %1843 = vmatpush1.bf16.msra.mxu0 %v1172
    %1844 = vmatprep.subr.bf16.mxu0 %v1169
    %1845 = vmatpush1.bf16.msra.mxu0 %v1168
    %1846 = vmatprep.subr.bf16.mxu0 %v1165
    %1847 = vmatpush1.bf16.msra.mxu0 %v1164
    %1848 = vmatprep.subr.bf16.mxu0 %v1161
    %1849 = vmatpush1.bf16.msra.mxu0 %v1160
    %1850 = vmatprep.subr.bf16.mxu0 %v1221
    %1851 = vmatpush2.bf16.msra.mxu0 %v1220
    %1852 = vmatprep.subr.bf16.mxu0 %v1217
    %1853 = vmatpush2.bf16.msra.mxu0 %v1216
    %1854 = vmatprep.subr.bf16.mxu0 %v1213
    %1855 = vmatpush2.bf16.msra.mxu0 %v1212
    %1856 = vmatprep.subr.bf16.mxu0 %v1209
    %1857 = vmatpush2.bf16.msra.mxu0 %v1208
    %1858 = vmatprep.subr.bf16.mxu0 %v1205
    %1859 = vmatpush2.bf16.msra.mxu0 %v1204
    %1860 = vmatprep.subr.bf16.mxu0 %v1201
    %1861 = vmatpush2.bf16.msra.mxu0 %v1200
    %1862 = vmatprep.subr.bf16.mxu0 %v1197
    %1863 = vmatpush2.bf16.msra.mxu0 %v1196
    %1864 = vmatprep.subr.bf16.mxu0 %v1193
    %1865 = vmatpush2.bf16.msra.mxu0 %v1192
    %1866 = vmatprep.mubr.bf16.mxu0 %v127
    %1867 = vmatmul.mubr.bf16.gmra.mxu0 %v126
    %v1868 = vpop.f32.mrf.mxu0
    %v1869 = vadd.f32 0.0, %v1868
    %v1870 = vpop.f32.mrf.mxu0
    %v1871 = vadd.f32 0.0, %v1870
    %v1872 = vpop.f32.mrf.mxu0
    %v1873 = vpop.f32.mrf.mxu0
    %1874 = vdwg.mxu0
    %1875 = vmatprep.subr.bf16.mxu0 %v1253
    %1876 = vmatpush1.bf16.msra.mxu0 %v1252
    %1877 = vmatprep.subr.bf16.mxu0 %v1249
    %1878 = vmatpush1.bf16.msra.mxu0 %v1248
    %1879 = vmatprep.subr.bf16.mxu0 %v1245
    %1880 = vmatpush1.bf16.msra.mxu0 %v1244
    %1881 = vmatprep.subr.bf16.mxu0 %v1241
    %1882 = vmatpush1.bf16.msra.mxu0 %v1240
    %1883 = vmatprep.subr.bf16.mxu0 %v1237
    %1884 = vmatpush1.bf16.msra.mxu0 %v1236
    %1885 = vmatprep.subr.bf16.mxu0 %v1233
    %1886 = vmatpush1.bf16.msra.mxu0 %v1232
    %1887 = vmatprep.subr.bf16.mxu0 %v1229
    %1888 = vmatpush1.bf16.msra.mxu0 %v1228
    %1889 = vmatprep.subr.bf16.mxu0 %v1225
    %1890 = vmatpush1.bf16.msra.mxu0 %v1224
    %1891 = vmatprep.subr.bf16.mxu0 %v1285
    %1892 = vmatpush2.bf16.msra.mxu0 %v1284
    %1893 = vmatprep.subr.bf16.mxu0 %v1281
    %1894 = vmatpush2.bf16.msra.mxu0 %v1280
    %1895 = vmatprep.subr.bf16.mxu0 %v1277
    %1896 = vmatpush2.bf16.msra.mxu0 %v1276
    %1897 = vmatprep.subr.bf16.mxu0 %v1273
    %1898 = vmatpush2.bf16.msra.mxu0 %v1272
    %1899 = vmatprep.subr.bf16.mxu0 %v1269
    %1900 = vmatpush2.bf16.msra.mxu0 %v1268
    %1901 = vmatprep.subr.bf16.mxu0 %v1265
    %1902 = vmatpush2.bf16.msra.mxu0 %v1264
    %1903 = vmatprep.subr.bf16.mxu0 %v1261
    %1904 = vmatpush2.bf16.msra.mxu0 %v1260
    %1905 = vmatprep.subr.bf16.mxu0 %v1257
    %1906 = vmatpush2.bf16.msra.mxu0 %v1256
    %1907 = vmatprep.mubr.bf16.mxu0 %v129
    %1908 = vmatmul.mubr.bf16.gmra.mxu0 %v128
    %v1909 = vpop.f32.mrf.mxu0
    %v1910 = vadd.f32 %v1869, %v1909
    %v1911 = vpop.f32.mrf.mxu0
    %v1912 = vadd.f32 %v1871, %v1911
    %v1913 = vpop.f32.mrf.mxu0
    %v1914 = vpop.f32.mrf.mxu0
    %1915 = vdwg.mxu0
    %1916 = vmatprep.subr.bf16.mxu0 %v1317
    %1917 = vmatpush1.bf16.msra.mxu0 %v1316
    %1918 = vmatprep.subr.bf16.mxu0 %v1313
    %1919 = vmatpush1.bf16.msra.mxu0 %v1312
    %1920 = vmatprep.subr.bf16.mxu0 %v1309
    %1921 = vmatpush1.bf16.msra.mxu0 %v1308
    %1922 = vmatprep.subr.bf16.mxu0 %v1305
    %1923 = vmatpush1.bf16.msra.mxu0 %v1304
    %1924 = vmatprep.subr.bf16.mxu0 %v1301
    %1925 = vmatpush1.bf16.msra.mxu0 %v1300
    %1926 = vmatprep.subr.bf16.mxu0 %v1297
    %1927 = vmatpush1.bf16.msra.mxu0 %v1296
    %1928 = vmatprep.subr.bf16.mxu0 %v1293
    %1929 = vmatpush1.bf16.msra.mxu0 %v1292
    %1930 = vmatprep.subr.bf16.mxu0 %v1289
    %1931 = vmatpush1.bf16.msra.mxu0 %v1288
    %1932 = vmatprep.subr.bf16.mxu0 %v1349
    %1933 = vmatpush2.bf16.msra.mxu0 %v1348
    %1934 = vmatprep.subr.bf16.mxu0 %v1345
    %1935 = vmatpush2.bf16.msra.mxu0 %v1344
    %1936 = vmatprep.subr.bf16.mxu0 %v1341
    %1937 = vmatpush2.bf16.msra.mxu0 %v1340
    %1938 = vmatprep.subr.bf16.mxu0 %v1337
    %1939 = vmatpush2.bf16.msra.mxu0 %v1336
    %1940 = vmatprep.subr.bf16.mxu0 %v1333
    %1941 = vmatpush2.bf16.msra.mxu0 %v1332
    %1942 = vmatprep.subr.bf16.mxu0 %v1329
    %1943 = vmatpush2.bf16.msra.mxu0 %v1328
    %1944 = vmatprep.subr.bf16.mxu0 %v1325
    %1945 = vmatpush2.bf16.msra.mxu0 %v1324
    %1946 = vmatprep.subr.bf16.mxu0 %v1321
    %1947 = vmatpush2.bf16.msra.mxu0 %v1320
    %1948 = vmatprep.mubr.bf16.mxu0 %v131
    %1949 = vmatmul.mubr.bf16.gmra.mxu0 %v130
    %v1950 = vpop.f32.mrf.mxu0
    %v1951 = vadd.f32 %v1910, %v1950
    %v1952 = vpop.f32.mrf.mxu0
    %v1953 = vadd.f32 %v1912, %v1952
    %v1954 = vpop.f32.mrf.mxu0
    %v1955 = vpop.f32.mrf.mxu0
    %1956 = vdwg.mxu0
    %1957 = vmatprep.subr.bf16.mxu0 %v1381
    %1958 = vmatpush1.bf16.msra.mxu0 %v1380
    %1959 = vmatprep.subr.bf16.mxu0 %v1377
    %1960 = vmatpush1.bf16.msra.mxu0 %v1376
    %1961 = vmatprep.subr.bf16.mxu0 %v1373
    %1962 = vmatpush1.bf16.msra.mxu0 %v1372
    %1963 = vmatprep.subr.bf16.mxu0 %v1369
    %1964 = vmatpush1.bf16.msra.mxu0 %v1368
    %1965 = vmatprep.subr.bf16.mxu0 %v1365
    %1966 = vmatpush1.bf16.msra.mxu0 %v1364
    %1967 = vmatprep.subr.bf16.mxu0 %v1361
    %1968 = vmatpush1.bf16.msra.mxu0 %v1360
    %1969 = vmatprep.subr.bf16.mxu0 %v1357
    %1970 = vmatpush1.bf16.msra.mxu0 %v1356
    %1971 = vmatprep.subr.bf16.mxu0 %v1353
    %1972 = vmatpush1.bf16.msra.mxu0 %v1352
    %1973 = vmatprep.subr.bf16.mxu0 %v1413
    %1974 = vmatpush2.bf16.msra.mxu0 %v1412
    %1975 = vmatprep.subr.bf16.mxu0 %v1409
    %1976 = vmatpush2.bf16.msra.mxu0 %v1408
    %1977 = vmatprep.subr.bf16.mxu0 %v1405
    %1978 = vmatpush2.bf16.msra.mxu0 %v1404
    %1979 = vmatprep.subr.bf16.mxu0 %v1401
    %1980 = vmatpush2.bf16.msra.mxu0 %v1400
    %1981 = vmatprep.subr.bf16.mxu0 %v1397
    %1982 = vmatpush2.bf16.msra.mxu0 %v1396
    %1983 = vmatprep.subr.bf16.mxu0 %v1393
    %1984 = vmatpush2.bf16.msra.mxu0 %v1392
    %1985 = vmatprep.subr.bf16.mxu0 %v1389
    %1986 = vmatpush2.bf16.msra.mxu0 %v1388
    %1987 = vmatprep.subr.bf16.mxu0 %v1385
    %1988 = vmatpush2.bf16.msra.mxu0 %v1384
    %1989 = vmatprep.mubr.bf16.mxu0 %v133
    %1990 = vmatmul.mubr.bf16.gmra.mxu0 %v132
    %v1991 = vpop.f32.mrf.mxu0
    %v1992 = vadd.f32 %v1951, %v1991
    %v1993 = vpop.f32.mrf.mxu0
    %v1994 = vadd.f32 %v1953, %v1993
    %v1995 = vpop.f32.mrf.mxu0
    %v1996 = vpop.f32.mrf.mxu0
    %1997 = vdwg.mxu0
    %v2002 = vcombine.low %v1828, %v1830
    %v2003 = vcombine.low %v1992, %v1994
    %v2005 = vunpack.c.l.s4 1983009808
    %v2006 = vunpack.c.0.s8 %v2005
    %v2007 = vlaneseq
    %v2008 = vshrl.u32 %v2007, 7
    %v2009 = vsub.s32 %v2006, %v2008
    %v2010 = vrot.slane %v2002, %v2009
    %v2012 = vunpack.c.l.s4 1983009808
    %v2013 = vunpack.c.0.s8 %v2012
    %v2014 = vlaneseq
    %v2015 = vshrl.u32 %v2014, 7
    %v2016 = vsub.s32 %v2013, %v2015
    %v2017 = vrot.slane %v2003, %v2016
    %v2018 = vcombine.low %v2010, %v2017
    %v2020 = vadd.f32 %v79, %v2018
    %2021 = vst [vmem:[#allocation2] sm:$0xff] %v2020
    // Predicated region
    $region42: #{tpu_custom_call.1} parent=1 // pred_check
      %p2022 = pneg %p74
    $region43: #{tpu_custom_call.1} parent=1 // pred_check_branch
      %2024 = sbr.rel (%p2022) target = $region45
    $region44: #{tpu_custom_call.1} parent=1 // pred_region
      %v2025 = vld [vmem:[#allocation2] sm:$0xff]
      %v2027 = vcombine.high %v2025, %v2025
      %v2029 = vunpack.c.l.s4 1983009808
      %v2030 = vunpack.c.0.s8 %v2029
      %v2031 = vlaneseq
      %v2032 = vshrl.u32 %v2031, 7
      %v2033 = vsub.s32 %v2030, %v2032
      %v2034 = vrot.slane %v2025, %v2033
      %v2036 = vunpack.c.l.s4 1983009808
      %v2037 = vunpack.c.0.s8 %v2036
      %v2038 = vlaneseq
      %v2039 = vshrl.u32 %v2038, 7
      %v2040 = vsub.s32 %v2037, %v2039
      %v2041 = vrot.slane %v2027, %v2040
      %v2042 = vcombine.high %v2034, %v2034
      %v2043 = vcombine.high %v2041, %v2041
      %v2048 = vpack.c.bf16 %v2034, %v2034
      %v2049 = vpack.c.bf16 %v2042, %v2042
      %v2050 = vpack.c.bf16 %v2041, %v2041
      %v2051 = vpack.c.bf16 %v2043, %v2043
      %v2052 = vld [vmem:[#allocation8] sm:$0xf]
      %v2054 = vlaneseq
      %v2055 = vshrl.u32 %v2054, 7
      %v2056 = vsub.s32 0, %v2055
      %v2057 = vrot.slane %v2052, %v2056
      %v2058 = vlaneseq
      %v2059 = vshrl.u32 %v2058, 7
      %v2060 = vsub.s32 1, %v2059
      %v2061 = vrot.slane %v2052, %v2060
      %v2062 = vlaneseq
      %v2063 = vshrl.u32 %v2062, 7
      %v2064 = vsub.s32 2, %v2063
      %v2065 = vrot.slane %v2052, %v2064
      %v2066 = vlaneseq
      %v2067 = vshrl.u32 %v2066, 7
      %v2068 = vsub.s32 3, %v2067
      %v2069 = vrot.slane %v2052, %v2068
      %v2074 = vpack.c.bf16 %v2057, %v2057
      %v2075 = vpack.c.bf16 %v2061, %v2061
      %v2076 = vpack.c.bf16 %v2065, %v2065
      %v2077 = vpack.c.bf16 %v2069, %v2069
      %v2079 = vpack.i.b16 %v2074, %v2074
      %v2081 = vlaneseq
      %v2082 = vshrl.u32 %v2081, 7
      %v2083 = vsub.s32 0, %v2082
      %v2084 = vrot.slane %v2079, %v2083
      %v2086 = vpack.i.b16 %v2075, %v2075
      %v2088 = vlaneseq
      %v2089 = vshrl.u32 %v2088, 7
      %v2090 = vsub.s32 0, %v2089
      %v2091 = vrot.slane %v2086, %v2090
      %v2093 = vpack.i.b16 %v2076, %v2076
      %v2095 = vlaneseq
      %v2096 = vshrl.u32 %v2095, 7
      %v2097 = vsub.s32 0, %v2096
      %v2098 = vrot.slane %v2093, %v2097
      %v2100 = vpack.i.b16 %v2077, %v2077
      %v2102 = vlaneseq
      %v2103 = vshrl.u32 %v2102, 7
      %v2104 = vsub.s32 0, %v2103
      %v2105 = vrot.slane %v2100, %v2104
      %v2106 = vadd.bf16 %v2048, %v2084
      %v2107 = vadd.bf16 %v2049, %v2091
      %v2108 = vadd.bf16 %v2050, %v2098
      %v2109 = vadd.bf16 %v2051, %v2105
      %vm2110 = vcmp.ge.bf16.partialorder %v2106, 0
      %vm2111 = vcmp.ge.bf16.partialorder %v2107, 0
      %vm2112 = vcmp.ge.bf16.partialorder %v2108, 0
      %vm2113 = vcmp.ge.bf16.partialorder %v2109, 0
      %v2114 = vmul.bf16 %v2106, 1009007652
      %v2115 = vmul.bf16 %v2107, 1009007652
      %v2116 = vmul.bf16 %v2108, 1009007652
      %v2117 = vmul.bf16 %v2109, 1009007652
      %v2118 = vsel %vm2110, %v2106, %v2114
      %v2119 = vsel %vm2111, %v2107, %v2115
      %v2120 = vsel %vm2112, %v2108, %v2116
      %v2121 = vsel %vm2113, %v2109, %v2117
      %v2122 = vld [vmem:[#allocation9] sm:$0xf]
      %v2123 = vld [vmem:[#allocation9 + $0x4] sm:$0xf]
      %v2124 = vld [vmem:[#allocation9 + $0x8] sm:$0xf]
      %v2125 = vld [vmem:[#allocation9 + $0xc] sm:$0xf]
      %v2126 = vld [vmem:[#allocation9 + $0x10] sm:$0xf]
      %v2127 = vld [vmem:[#allocation9 + $0x14] sm:$0xf]
      %v2128 = vld [vmem:[#allocation9 + $0x18] sm:$0xf]
      %v2129 = vld [vmem:[#allocation9 + $0x1c] sm:$0xf]
      %v2130 = vld [vmem:[#allocation9 + $0x20] sm:$0xf]
      %v2131 = vld [vmem:[#allocation9 + $0x24] sm:$0xf]
      %v2132 = vld [vmem:[#allocation9 + $0x28] sm:$0xf]
      %v2133 = vld [vmem:[#allocation9 + $0x2c] sm:$0xf]
      %v2134 = vld [vmem:[#allocation9 + $0x30] sm:$0xf]
      %v2135 = vld [vmem:[#allocation9 + $0x34] sm:$0xf]
      %v2136 = vld [vmem:[#allocation9 + $0x38] sm:$0xf]
      %v2137 = vld [vmem:[#allocation9 + $0x3c] sm:$0xf]
      %v2138 = vld [vmem:[#allocation9 + $0x40] sm:$0xf]
      %v2139 = vld [vmem:[#allocation9 + $0x44] sm:$0xf]
      %v2140 = vld [vmem:[#allocation9 + $0x48] sm:$0xf]
      %v2141 = vld [vmem:[#allocation9 + $0x4c] sm:$0xf]
      %v2142 = vld [vmem:[#allocation9 + $0x50] sm:$0xf]
      %v2143 = vld [vmem:[#allocation9 + $0x54] sm:$0xf]
      %v2144 = vld [vmem:[#allocation9 + $0x58] sm:$0xf]
      %v2145 = vld [vmem:[#allocation9 + $0x5c] sm:$0xf]
      %v2146 = vld [vmem:[#allocation9 + $0x60] sm:$0xf]
      %v2147 = vld [vmem:[#allocation9 + $0x64] sm:$0xf]
      %v2148 = vld [vmem:[#allocation9 + $0x68] sm:$0xf]
      %v2149 = vld [vmem:[#allocation9 + $0x6c] sm:$0xf]
      %v2150 = vld [vmem:[#allocation9 + $0x70] sm:$0xf]
      %v2151 = vld [vmem:[#allocation9 + $0x74] sm:$0xf]
      %v2152 = vld [vmem:[#allocation9 + $0x78] sm:$0xf]
      %v2153 = vld [vmem:[#allocation9 + $0x7c] sm:$0xf]
      %v2154 = vld [vmem:[#allocation9 + $0x80] sm:$0xf]
      %v2155 = vld [vmem:[#allocation9 + $0x84] sm:$0xf]
      %v2156 = vld [vmem:[#allocation9 + $0x88] sm:$0xf]
      %v2157 = vld [vmem:[#allocation9 + $0x8c] sm:$0xf]
      %v2158 = vld [vmem:[#allocation9 + $0x90] sm:$0xf]
      %v2159 = vld [vmem:[#allocation9 + $0x94] sm:$0xf]
      %v2160 = vld [vmem:[#allocation9 + $0x98] sm:$0xf]
      %v2161 = vld [vmem:[#allocation9 + $0x9c] sm:$0xf]
      %v2162 = vld [vmem:[#allocation9 + $0xa0] sm:$0xf]
      %v2163 = vld [vmem:[#allocation9 + $0xa4] sm:$0xf]
      %v2164 = vld [vmem:[#allocation9 + $0xa8] sm:$0xf]
      %v2165 = vld [vmem:[#allocation9 + $0xac] sm:$0xf]
      %v2166 = vld [vmem:[#allocation9 + $0xb0] sm:$0xf]
      %v2167 = vld [vmem:[#allocation9 + $0xb4] sm:$0xf]
      %v2168 = vld [vmem:[#allocation9 + $0xb8] sm:$0xf]
      %v2169 = vld [vmem:[#allocation9 + $0xbc] sm:$0xf]
      %v2170 = vld [vmem:[#allocation9 + $0xc0] sm:$0xf]
      %v2171 = vld [vmem:[#allocation9 + $0xc4] sm:$0xf]
      %v2172 = vld [vmem:[#allocation9 + $0xc8] sm:$0xf]
      %v2173 = vld [vmem:[#allocation9 + $0xcc] sm:$0xf]
      %v2174 = vld [vmem:[#allocation9 + $0xd0] sm:$0xf]
      %v2175 = vld [vmem:[#allocation9 + $0xd4] sm:$0xf]
      %v2176 = vld [vmem:[#allocation9 + $0xd8] sm:$0xf]
      %v2177 = vld [vmem:[#allocation9 + $0xdc] sm:$0xf]
      %v2178 = vld [vmem:[#allocation9 + $0xe0] sm:$0xf]
      %v2179 = vld [vmem:[#allocation9 + $0xe4] sm:$0xf]
      %v2180 = vld [vmem:[#allocation9 + $0xe8] sm:$0xf]
      %v2181 = vld [vmem:[#allocation9 + $0xec] sm:$0xf]
      %v2182 = vld [vmem:[#allocation9 + $0xf0] sm:$0xf]
      %v2183 = vld [vmem:[#allocation9 + $0xf4] sm:$0xf]
      %v2184 = vld [vmem:[#allocation9 + $0xf8] sm:$0xf]
      %v2185 = vld [vmem:[#allocation9 + $0xfc] sm:$0xf]
      %v2186 = vld [vmem:[%s4] sm:$0x1]
      %v2188 = vlaneseq
      %v2189 = vshrl.u32 %v2188, 7
      %v2190 = vsub.s32 0, %v2189
      %v2191 = vrot.slane %v2186, %v2190
      %v2257 = vunpack.c.l.b16 %v2122
      %v2258 = vunpack.c.l.b16 %v2123
      %v2259 = vunpack.c.l.b16 %v2124
      %v2260 = vunpack.c.l.b16 %v2125
      %v2261 = vunpack.c.l.b16 %v2126
      %v2262 = vunpack.c.l.b16 %v2127
      %v2263 = vunpack.c.l.b16 %v2128
      %v2264 = vunpack.c.l.b16 %v2129
      %v2265 = vunpack.c.l.b16 %v2130
      %v2266 = vunpack.c.l.b16 %v2131
      %v2267 = vunpack.c.l.b16 %v2132
      %v2268 = vunpack.c.l.b16 %v2133
      %v2269 = vunpack.c.l.b16 %v2134
      %v2270 = vunpack.c.l.b16 %v2135
      %v2271 = vunpack.c.l.b16 %v2136
      %v2272 = vunpack.c.l.b16 %v2137
      %v2273 = vunpack.c.l.b16 %v2138
      %v2274 = vunpack.c.l.b16 %v2139
      %v2275 = vunpack.c.l.b16 %v2140
      %v2276 = vunpack.c.l.b16 %v2141
      %v2277 = vunpack.c.l.b16 %v2142
      %v2278 = vunpack.c.l.b16 %v2143
      %v2279 = vunpack.c.l.b16 %v2144
      %v2280 = vunpack.c.l.b16 %v2145
      %v2281 = vunpack.c.l.b16 %v2146
      %v2282 = vunpack.c.l.b16 %v2147
      %v2283 = vunpack.c.l.b16 %v2148
      %v2284 = vunpack.c.l.b16 %v2149
      %v2285 = vunpack.c.l.b16 %v2150
      %v2286 = vunpack.c.l.b16 %v2151
      %v2287 = vunpack.c.l.b16 %v2152
      %v2288 = vunpack.c.l.b16 %v2153
      %v2289 = vunpack.c.l.b16 %v2154
      %v2290 = vunpack.c.l.b16 %v2155
      %v2291 = vunpack.c.l.b16 %v2156
      %v2292 = vunpack.c.l.b16 %v2157
      %v2293 = vunpack.c.l.b16 %v2158
      %v2294 = vunpack.c.l.b16 %v2159
      %v2295 = vunpack.c.l.b16 %v2160
      %v2296 = vunpack.c.l.b16 %v2161
      %v2297 = vunpack.c.l.b16 %v2162
      %v2298 = vunpack.c.l.b16 %v2163
      %v2299 = vunpack.c.l.b16 %v2164
      %v2300 = vunpack.c.l.b16 %v2165
      %v2301 = vunpack.c.l.b16 %v2166
      %v2302 = vunpack.c.l.b16 %v2167
      %v2303 = vunpack.c.l.b16 %v2168
      %v2304 = vunpack.c.l.b16 %v2169
      %v2305 = vunpack.c.l.b16 %v2170
      %v2306 = vunpack.c.l.b16 %v2171
      %v2307 = vunpack.c.l.b16 %v2172
      %v2308 = vunpack.c.l.b16 %v2173
      %v2309 = vunpack.c.l.b16 %v2174
      %v2310 = vunpack.c.l.b16 %v2175
      %v2311 = vunpack.c.l.b16 %v2176
      %v2312 = vunpack.c.l.b16 %v2177
      %v2313 = vunpack.c.l.b16 %v2178
      %v2314 = vunpack.c.l.b16 %v2179
      %v2315 = vunpack.c.l.b16 %v2180
      %v2316 = vunpack.c.l.b16 %v2181
      %v2317 = vunpack.c.l.b16 %v2182
      %v2318 = vunpack.c.l.b16 %v2183
      %v2319 = vunpack.c.l.b16 %v2184
      %v2320 = vunpack.c.l.b16 %v2185
      %v2321 = vpack.c.b16 %v2258, %v2257
      %v2322 = vpack.c.b16 %v2260, %v2259
      %v2323 = vpack.c.b16 %v2262, %v2261
      %v2324 = vpack.c.b16 %v2264, %v2263
      %v2325 = vpack.c.b16 %v2266, %v2265
      %v2326 = vpack.c.b16 %v2268, %v2267
      %v2327 = vpack.c.b16 %v2270, %v2269
      %v2328 = vpack.c.b16 %v2272, %v2271
      %v2329 = vpack.c.b16 %v2274, %v2273
      %v2330 = vpack.c.b16 %v2276, %v2275
      %v2331 = vpack.c.b16 %v2278, %v2277
      %v2332 = vpack.c.b16 %v2280, %v2279
      %v2333 = vpack.c.b16 %v2282, %v2281
      %v2334 = vpack.c.b16 %v2284, %v2283
      %v2335 = vpack.c.b16 %v2286, %v2285
      %v2336 = vpack.c.b16 %v2288, %v2287
      %v2337 = vpack.c.b16 %v2290, %v2289
      %v2338 = vpack.c.b16 %v2292, %v2291
      %v2339 = vpack.c.b16 %v2294, %v2293
      %v2340 = vpack.c.b16 %v2296, %v2295
      %v2341 = vpack.c.b16 %v2298, %v2297
      %v2342 = vpack.c.b16 %v2300, %v2299
      %v2343 = vpack.c.b16 %v2302, %v2301
      %v2344 = vpack.c.b16 %v2304, %v2303
      %v2345 = vpack.c.b16 %v2306, %v2305
      %v2346 = vpack.c.b16 %v2308, %v2307
      %v2347 = vpack.c.b16 %v2310, %v2309
      %v2348 = vpack.c.b16 %v2312, %v2311
      %v2349 = vpack.c.b16 %v2314, %v2313
      %v2350 = vpack.c.b16 %v2316, %v2315
      %v2351 = vpack.c.b16 %v2318, %v2317
      %v2352 = vpack.c.b16 %v2320, %v2319
      %2385 = vmatprep.subr.bf16.mxu0 0
      %2386 = vmatpush1.bf16.msra.mxu0 %v2328
      %2387 = vmatprep.subr.bf16.mxu0 0
      %2388 = vmatpush1.bf16.msra.mxu0 %v2327
      %2389 = vmatprep.subr.bf16.mxu0 0
      %2390 = vmatpush1.bf16.msra.mxu0 %v2326
      %2391 = vmatprep.subr.bf16.mxu0 0
      %2392 = vmatpush1.bf16.msra.mxu0 %v2325
      %2393 = vmatprep.subr.bf16.mxu0 0
      %2394 = vmatpush1.bf16.msra.mxu0 %v2324
      %2395 = vmatprep.subr.bf16.mxu0 0
      %2396 = vmatpush1.bf16.msra.mxu0 %v2323
      %2397 = vmatprep.subr.bf16.mxu0 0
      %2398 = vmatpush1.bf16.msra.mxu0 %v2322
      %2399 = vmatprep.subr.bf16.mxu0 0
      %2400 = vmatpush1.bf16.msra.mxu0 %v2321
      %2401 = vmatprep.subr.bf16.mxu0 0
      %2402 = vmatpush2.bf16.msra.mxu0 %v2336
      %2403 = vmatprep.subr.bf16.mxu0 0
      %2404 = vmatpush2.bf16.msra.mxu0 %v2335
      %2405 = vmatprep.subr.bf16.mxu0 0
      %2406 = vmatpush2.bf16.msra.mxu0 %v2334
      %2407 = vmatprep.subr.bf16.mxu0 0
      %2408 = vmatpush2.bf16.msra.mxu0 %v2333
      %2409 = vmatprep.subr.bf16.mxu0 0
      %2410 = vmatpush2.bf16.msra.mxu0 %v2332
      %2411 = vmatprep.subr.bf16.mxu0 0
      %2412 = vmatpush2.bf16.msra.mxu0 %v2331
      %2413 = vmatprep.subr.bf16.mxu0 0
      %2414 = vmatpush2.bf16.msra.mxu0 %v2330
      %2415 = vmatprep.subr.bf16.mxu0 0
      %2416 = vmatpush2.bf16.msra.mxu0 %v2329
      %2417 = vmatprep.mubr.bf16.mxu0 %v2119
      %2418 = vmatmul.mubr.bf16.gmra.mxu0 %v2118
      %v2419 = vpop.f32.mrf.mxu0
      %v2420 = vadd.f32 %v2191, %v2419
      %v2421 = vpop.f32.mrf.mxu0
      %v2422 = vpop.f32.mrf.mxu0
      %v2423 = vpop.f32.mrf.mxu0
      %2424 = vdwg.mxu0
      %2425 = vmatprep.subr.bf16.mxu0 0
      %2426 = vmatpush1.bf16.msra.mxu0 %v2344
      %2427 = vmatprep.subr.bf16.mxu0 0
      %2428 = vmatpush1.bf16.msra.mxu0 %v2343
      %2429 = vmatprep.subr.bf16.mxu0 0
      %2430 = vmatpush1.bf16.msra.mxu0 %v2342
      %2431 = vmatprep.subr.bf16.mxu0 0
      %2432 = vmatpush1.bf16.msra.mxu0 %v2341
      %2433 = vmatprep.subr.bf16.mxu0 0
      %2434 = vmatpush1.bf16.msra.mxu0 %v2340
      %2435 = vmatprep.subr.bf16.mxu0 0
      %2436 = vmatpush1.bf16.msra.mxu0 %v2339
      %2437 = vmatprep.subr.bf16.mxu0 0
      %2438 = vmatpush1.bf16.msra.mxu0 %v2338
      %2439 = vmatprep.subr.bf16.mxu0 0
      %2440 = vmatpush1.bf16.msra.mxu0 %v2337
      %2441 = vmatprep.subr.bf16.mxu0 0
      %2442 = vmatpush2.bf16.msra.mxu0 %v2352
      %2443 = vmatprep.subr.bf16.mxu0 0
      %2444 = vmatpush2.bf16.msra.mxu0 %v2351
      %2445 = vmatprep.subr.bf16.mxu0 0
      %2446 = vmatpush2.bf16.msra.mxu0 %v2350
      %2447 = vmatprep.subr.bf16.mxu0 0
      %2448 = vmatpush2.bf16.msra.mxu0 %v2349
      %2449 = vmatprep.subr.bf16.mxu0 0
      %2450 = vmatpush2.bf16.msra.mxu0 %v2348
      %2451 = vmatprep.subr.bf16.mxu0 0
      %2452 = vmatpush2.bf16.msra.mxu0 %v2347
      %2453 = vmatprep.subr.bf16.mxu0 0
      %2454 = vmatpush2.bf16.msra.mxu0 %v2346
      %2455 = vmatprep.subr.bf16.mxu0 0
      %2456 = vmatpush2.bf16.msra.mxu0 %v2345
      %2457 = vmatprep.mubr.bf16.mxu0 %v2121
      %2458 = vmatmul.mubr.bf16.gmra.mxu0 %v2120
      %v2459 = vpop.f32.mrf.mxu0
      %v2460 = vadd.f32 %v2420, %v2459
      %v2461 = vpop.f32.mrf.mxu0
      %v2462 = vpop.f32.mrf.mxu0
      %v2463 = vpop.f32.mrf.mxu0
      %2464 = vdwg.mxu0
      %2465 = vst [vmem:[#allocation11] sm:$0x3] %v2460
    $region45: #{tpu_custom_call.1} parent=1 // pred_fallthru
      _
    // Predicated region
    $region46: #{tpu_custom_call.1} parent=1 // pred_check
      _
    $region47: #{tpu_custom_call.1} parent=1 // pred_check_branch
      %2467 = sbr.rel (0) target = $region49
    $region48: #{tpu_custom_call.1} parent=1 // pred_region
      %s2469 = ssub.s32 32, 32
      %2470 = vsyncadd [#allocation5], %s2469
      %s2472 = sshll.u32 [#allocation11], 4
      %s2473 = int_to_ptr.vmem [resolvable:$true] %s2472
      %2475 = dma.vmem_to_hbm [thread:$0]  %s2473, 32, %s5, [#allocation5]
    $region49: #{tpu_custom_call.1} parent=1 // pred_fallthru
      _
    // Predicated region
    $region50: #{tpu_custom_call.1} parent=1 // pred_check
      _
    $region51: #{tpu_custom_call.1} parent=1 // pred_check_branch
      %2477 = sbr.rel (0) target = $region53
    $region52: #{tpu_custom_call.1} parent=1 // pred_region
      %2478 = dma.done [#allocation5], 32
    $region53: #{tpu_custom_call.1} parent=1 // pred_fallthru
      _
    %2479 = vsyncpa [#allocation4], 1
    %2480 = vsyncpa [#allocation7], 1
    %2481 = vsyncpa [#allocation10], 1
    %2482 = vsyncpa [#allocation5], 1

</llo_original>
